<compile_context>
chip_gen: v6e
topology: v6e:2x2x1
jax: 0.10.0
libtpu: 0.0.40
codegen_flags: <defaults>
</compile_context>

<pallas_src>
import functools
import math

import jax
import jax.numpy as jnp
from jax.experimental import pallas as pl
from jax.experimental.pallas import tpu as pltpu


def _enc_layer_kernel(
    q_ref, k_ref, v_ref, bias_ref,
    wq_ref, bq_ref, wk_ref, bk_ref, wv_ref, bv_ref, wo_ref, bo_ref,
    ln1g_ref, ln1b_ref,
    w1_ref, b1_ref, w2_ref, b2_ref,
    ln2g_ref, ln2b_ref,
    out_ref,
    q_scr, k_scr, v_scr, ctx_scr,
    *, num_head, head_dim,
):
    eps = 1e-5
    f32 = jnp.float32
    bf16 = jnp.bfloat16

    # --- K/V projection: computed once per batch element and cached in VMEM
    # scratch across every query tile of that batch element.  Full-width N=H
    # matmuls (fills MXU lanes instead of N=head_dim per-head matmuls).
    @pl.when(pl.program_id(1) == 0)
    def _project_kv():
        kp = jnp.dot(k_ref[0], wk_ref[...], preferred_element_type=f32) + bk_ref[...]
        k_scr[...] = kp.astype(bf16)
        vp = jnp.dot(v_ref[0], wv_ref[...], preferred_element_type=f32) + bv_ref[...]
        v_scr[...] = vp.astype(bf16)

    # --- Q projection for this query tile (1/sqrt(d) already folded into wq/bq).
    src_q = q_ref[0]                                            # (TQ, H) f32 (residual)
    qp = jnp.dot(src_q.astype(bf16), wq_ref[...], preferred_element_type=f32) + bq_ref[...]
    q_scr[...] = qp.astype(bf16)                                # lane-dense (TQ, H) staging

    mask_bias = bias_ref[0].astype(f32)                         # (TQ, S) additive 0 / -1e9

    # --- Attention core: per-head loop over lane slices of the lane-dense
    # (TQ,H)/(S,H) buffers.  At realistic head_dim=128 the slices are lane-tile
    # aligned; per-head processing also keeps only one (TQ,S) f32 score tensor
    # live at a time (instead of (num_head,TQ,S)).
    for h in range(num_head):
        lo = h * head_dim
        hi = lo + head_dim
        qh = q_scr[:, lo:hi]                                    # (TQ, hd) bf16
        kh = k_scr[:, lo:hi]                                    # (S,  hd) bf16
        vh = v_scr[:, lo:hi]                                    # (S,  hd) bf16
        s = jax.lax.dot_general(qh, kh, (((1,), (1,)), ((), ())),
                                preferred_element_type=f32)     # (TQ, S) = q @ k^T
        s = s + mask_bias
        m = jnp.max(s, axis=-1, keepdims=True)
        e = jnp.exp(s - m)
        denom = jnp.sum(e, axis=-1, keepdims=True)
        p = (e * pl.reciprocal(denom, approx=True)).astype(bf16)  # divide on EUP
        ctx_h = jnp.dot(p, vh, preferred_element_type=f32)      # (TQ, hd)
        ctx_scr[:, lo:hi] = ctx_h.astype(bf16)                  # head-concat layout (== PyTorch view)

    # --- Output projection: single matmul, K = H contraction.
    attn = jnp.dot(ctx_scr[...], wo_ref[...], preferred_element_type=f32) + bo_ref[...]

    # --- dropout(=identity, eval) + residual + LayerNorm (f32 VPU math).
    x = attn + src_q
    mu = jnp.mean(x, axis=-1, keepdims=True)
    var = jnp.mean((x - mu) * (x - mu), axis=-1, keepdims=True)
    x = (x - mu) * jax.lax.rsqrt(var + eps) * ln1g_ref[...] + ln1b_ref[...]

    # --- Position-wise FFN (bf16 MXU operands, f32 accumulation) + residual + LN.
    h1 = jnp.dot(x.astype(bf16), w1_ref[...], preferred_element_type=f32) + b1_ref[...]
    h1 = jnp.maximum(h1, 0.0)
    y = jnp.dot(h1.astype(bf16), w2_ref[...], preferred_element_type=f32) + b2_ref[...]
    y = y + x
    mu2 = jnp.mean(y, axis=-1, keepdims=True)
    var2 = jnp.mean((y - mu2) * (y - mu2), axis=-1, keepdims=True)
    out_ref[0] = (y - mu2) * jax.lax.rsqrt(var2 + eps) * ln2g_ref[...] + ln2b_ref[...]


def my_enc_layer(srcQ, srcK, srcV, attn_mask, params, *, num_head):
    B, S, H = srcQ.shape
    hd = H // num_head
    F = params["w1"].shape[1]
    scale = 1.0 / math.sqrt(hd)

    # Query-row tile: bounds per-step VMEM independently of S (toy S=8 -> one tile).
    TQ = S if S <= 128 else 128
    assert S % TQ == 0 and TQ % 8 == 0, "S must tile into multiples of 8"
    n_qt = S // TQ

    bf16, f32 = jnp.bfloat16, jnp.float32

    # Weight prep (one-off, pure JAX): bf16 MXU operands, scale folded into Q proj.
    wq = (params["wq"] * scale).astype(bf16)
    bq = (params["bq"] * scale).astype(f32)
    wk = params["wk"].astype(bf16)
    wv = params["wv"].astype(bf16)
    wo = params["wo"].astype(bf16)
    w1 = params["w1"].astype(bf16)
    w2 = params["w2"].astype(bf16)

    # K/V activations only ever feed the MXU -> ship as bf16 (halves DMA + VMEM).
    srcK_b = srcK.astype(bf16)
    srcV_b = srcV.astype(bf16)
    # Pre-baked additive mask bias, bf16 (-1e9 representable; promoted to f32 in-kernel).
    mask_bias = jnp.where(attn_mask != 0, -1e9, 0.0).astype(bf16)

    act_q = pl.BlockSpec((1, TQ, H), lambda b, qi: (b, qi, 0))
    act_kv = pl.BlockSpec((1, S, H), lambda b, qi: (b, 0, 0))
    mask_spec = pl.BlockSpec((1, TQ, S), lambda b, qi: (b, qi, 0))

    def full(shape):
        nd = len(shape)
        return pl.BlockSpec(shape, lambda b, qi: (0,) * nd)

    in_specs = [
        act_q, act_kv, act_kv, mask_spec,
        full((H, H)), full((1, H)),        # wq (scaled), bq (scaled)
        full((H, H)), full((1, H)),        # wk, bk
        full((H, H)), full((1, H)),        # wv, bv
        full((H, H)), full((1, H)),        # wo, bo
        full((1, H)), full((1, H)),        # ln1 gamma, beta
        full((H, F)), full((1, F)),        # w1, b1
        full((F, H)), full((1, H)),        # w2, b2
        full((1, H)), full((1, H)),        # ln2 gamma, beta
    ]

    kernel = functools.partial(_enc_layer_kernel, num_head=num_head, head_dim=hd)

    return pl.pallas_call(
        kernel,
        out_shape=jax.ShapeDtypeStruct((B, S, H), f32),
        grid_spec=pltpu.PrefetchScalarGridSpec(
            num_scalar_prefetch=0,
            grid=(B, n_qt),
            in_specs=in_specs,
            out_specs=pl.BlockSpec((1, TQ, H), lambda b, qi: (b, qi, 0)),
            scratch_shapes=[
                pltpu.VMEM((TQ, H), bf16),   # Q staging (lane-dense)
                pltpu.VMEM((S, H), bf16),    # K cache (per batch element)
                pltpu.VMEM((S, H), bf16),    # V cache (per batch element)
                pltpu.VMEM((TQ, H), bf16),   # head-concat context staging
            ],
        ),
        compiler_params=pltpu.CompilerParams(
            # b is independent (megacore-shardable); qi must run sequentially so
            # the K/V scratch cache computed at qi == 0 stays valid for qi > 0.
            dimension_semantics=("parallel", "arbitrary"),
            # 48 MiB scoped budget: headroom on v7x (64 MiB physical), still
            # generous on v5e/v6e (128 MiB physical).
            vmem_limit_bytes=48 * 1024 * 1024,
        ),
    )(
        srcQ, srcK_b, srcV_b, mask_bias,
        wq, bq, wk, params["bk"], wv, params["bv"], wo, params["bo"],
        params["ln1_g"], params["ln1_b"],
        w1, params["b1"], w2, params["b2"],
        params["ln2_g"], params["ln2_b"],
    )


def _ln(x, g, b, eps=1e-5):
    mu = jnp.mean(x, axis=-1, keepdims=True)
    var = jnp.mean((x - mu) ** 2, axis=-1, keepdims=True)
    return (x - mu) * jax.lax.rsqrt(var + eps) * g + b


def _reference(srcQ, srcK, srcV, attn_mask, params, *, num_head):
    """Pure-JAX reference mirroring the PyTorch forward (eval-mode dropout) with
    the same bf16-for-MXU / f32-elsewhere dtype policy as the kernel."""
    B, S, H = srcQ.shape
    hd = H // num_head
    scale = 1.0 / math.sqrt(hd)
    bf = lambda t: t.astype(jnp.bfloat16)

    def proj(x, w, b):
        return jnp.dot(bf(x), bf(w), preferred_element_type=jnp.float32) + b

    Q = bf(proj(srcQ, params["wq"], params["bq"]) * scale)
    K = bf(proj(srcK, params["wk"], params["bk"]))
    V = bf(proj(srcV, params["wv"], params["bv"]))
    Q = Q.reshape(B, S, num_head, hd).transpose(0, 2, 1, 3)
    K = K.reshape(B, S, num_head, hd).transpose(0, 2, 1, 3)
    V = V.reshape(B, S, num_head, hd).transpose(0, 2, 1, 3)
    s = jnp.einsum("bhqd,bhkd->bhqk", Q, K, preferred_element_type=jnp.float32)
    # additive -1e9 bias is equivalent to masked_fill(-1e9): masked probs == 0 in both
    s = s + jnp.where(attn_mask[:, None, :, :] != 0, jnp.float32(-1e9), jnp.float32(0.0))
    p = jax.nn.softmax(s, axis=-1)
    ctx = jnp.einsum("bhqk,bhkd->bhqd", bf(p), V, preferred_element_type=jnp.float32)
    ctx = ctx.transpose(0, 2, 1, 3).reshape(B, S, H)
    attn = jnp.dot(bf(ctx), bf(params["wo"]), preferred_element_type=jnp.float32) + params["bo"]
    x = _ln(attn + srcQ, params["ln1_g"][0], params["ln1_b"][0])
    h1 = jnp.maximum(
        jnp.dot(bf(x), bf(params["w1"]), preferred_element_type=jnp.float32) + params["b1"], 0.0)
    y = jnp.dot(bf(h1), bf(params["w2"]), preferred_element_type=jnp.float32) + params["b2"]
    y = y + x
    return _ln(y, params["ln2_g"][0], params["ln2_b"][0])


if __name__ == "__main__":
    B, S, H = 2, 8, 32
    num_head, FFNN_dim = 4, 64

    key = jax.random.PRNGKey(0)
    ks = jax.random.split(key, 16)

    def lin(kw, fan_in, fan_out):
        # deterministic small-scale init, stored as [in, out]
        return (jax.random.normal(kw, (fan_in, fan_out), jnp.float32)
                / math.sqrt(fan_in))

    params = {
        "wq": lin(ks[0], H, H), "bq": jax.random.normal(ks[1], (1, H)) * 0.02,
        "wk": lin(ks[2], H, H), "bk": jax.random.normal(ks[3], (1, H)) * 0.02,
        "wv": lin(ks[4], H, H), "bv": jax.random.normal(ks[5], (1, H)) * 0.02,
        "wo": lin(ks[6], H, H), "bo": jax.random.normal(ks[7], (1, H)) * 0.02,
        "ln1_g": jnp.ones((1, H), jnp.float32), "ln1_b": jnp.zeros((1, H), jnp.float32),
        "w1": lin(ks[8], H, FFNN_dim), "b1": jax.random.normal(ks[9], (1, FFNN_dim)) * 0.02,
        "w2": lin(ks[10], FFNN_dim, H), "b2": jax.random.normal(ks[11], (1, H)) * 0.02,
        "ln2_g": jnp.ones((1, H), jnp.float32), "ln2_b": jnp.zeros((1, H), jnp.float32),
    }

    srcQ = jax.random.normal(ks[12], (B, S, H), jnp.float32)
    srcK = jax.random.normal(ks[13], (B, S, H), jnp.float32)
    srcV = jax.random.normal(ks[14], (B, S, H), jnp.float32)
    # random boolean mask (True/1 -> masked), as int32
    attn_mask = (jax.random.uniform(ks[15], (B, S, S)) < 0.2).astype(jnp.int32)

    out = my_enc_layer(srcQ, srcK, srcV, attn_mask, params, num_head=num_head)
    out = jax.block_until_ready(out)

    ref = _reference(srcQ, srcK, srcV, attn_mask, params, num_head=num_head)
    assert out.shape == (B, S, H)
    # bf16 MXU operands + approx reciprocal -> compare at bf16-level tolerance
    assert jnp.allclose(out, ref, atol=2e-2, rtol=2e-2), "mismatch vs reference"

    print("KERNEL_OK")
</pallas_src>

<mosaic_0001>
module attributes {stable_mosaic.version = 11 : i64} {
  func.func @_enc_layer_kernel(%arg0: i32, %arg1: i32, %arg2: memref<1x8x32xf32, #tpu.memory_space<vmem>>, %arg3: memref<1x8x32xbf16, #tpu.memory_space<vmem>>, %arg4: memref<1x8x32xbf16, #tpu.memory_space<vmem>>, %arg5: memref<1x8x8xbf16, #tpu.memory_space<vmem>>, %arg6: memref<32x32xbf16, #tpu.memory_space<vmem>>, %arg7: memref<1x32xf32, #tpu.memory_space<vmem>>, %arg8: memref<32x32xbf16, #tpu.memory_space<vmem>>, %arg9: memref<1x32xf32, #tpu.memory_space<vmem>>, %arg10: memref<32x32xbf16, #tpu.memory_space<vmem>>, %arg11: memref<1x32xf32, #tpu.memory_space<vmem>>, %arg12: memref<32x32xbf16, #tpu.memory_space<vmem>>, %arg13: memref<1x32xf32, #tpu.memory_space<vmem>>, %arg14: memref<1x32xf32, #tpu.memory_space<vmem>>, %arg15: memref<1x32xf32, #tpu.memory_space<vmem>>, %arg16: memref<32x64xbf16, #tpu.memory_space<vmem>>, %arg17: memref<1x64xf32, #tpu.memory_space<vmem>>, %arg18: memref<64x32xbf16, #tpu.memory_space<vmem>>, %arg19: memref<1x32xf32, #tpu.memory_space<vmem>>, %arg20: memref<1x32xf32, #tpu.memory_space<vmem>>, %arg21: memref<1x32xf32, #tpu.memory_space<vmem>>, %arg22: memref<1x8x32xf32, #tpu.memory_space<vmem>>, %arg23: memref<8x32xbf16, #tpu.memory_space<vmem>>, %arg24: memref<8x32xbf16, #tpu.memory_space<vmem>>, %arg25: memref<8x32xbf16, #tpu.memory_space<vmem>>, %arg26: memref<8x32xbf16, #tpu.memory_space<vmem>>) attributes {dimension_semantics = [#tpu.dimension_semantics<parallel>, #tpu.dimension_semantics<arbitrary>], iteration_bounds = array<i64: 2, 1>, scalar_prefetch = 0 : i64, scratch_operands = 4 : i64, tpu.core_type = #tpu.core_type<tc>, window_params = [{transform_indices = @transform_0, window_bounds = array<i64: 1, 8, 32>}, {transform_indices = @transform_1, window_bounds = array<i64: 1, 8, 32>}, {transform_indices = @transform_2, window_bounds = array<i64: 1, 8, 32>}, {transform_indices = @transform_3, window_bounds = array<i64: 1, 8, 8>}, {pipeline_mode = #tpu.pipeline_mode<synchronous>, transform_indices = @transform_4, window_bounds = array<i64: 32, 32>}, {pipeline_mode = #tpu.pipeline_mode<synchronous>, transform_indices = @transform_5, window_bounds = array<i64: 1, 32>}, {pipeline_mode = #tpu.pipeline_mode<synchronous>, transform_indices = @transform_6, window_bounds = array<i64: 32, 32>}, {pipeline_mode = #tpu.pipeline_mode<synchronous>, transform_indices = @transform_7, window_bounds = array<i64: 1, 32>}, {pipeline_mode = #tpu.pipeline_mode<synchronous>, transform_indices = @transform_8, window_bounds = array<i64: 32, 32>}, {pipeline_mode = #tpu.pipeline_mode<synchronous>, transform_indices = @transform_9, window_bounds = array<i64: 1, 32>}, {pipeline_mode = #tpu.pipeline_mode<synchronous>, transform_indices = @transform_10, window_bounds = array<i64: 32, 32>}, {pipeline_mode = #tpu.pipeline_mode<synchronous>, transform_indices = @transform_11, window_bounds = array<i64: 1, 32>}, {pipeline_mode = #tpu.pipeline_mode<synchronous>, transform_indices = @transform_12, window_bounds = array<i64: 1, 32>}, {pipeline_mode = #tpu.pipeline_mode<synchronous>, transform_indices = @transform_13, window_bounds = array<i64: 1, 32>}, {pipeline_mode = #tpu.pipeline_mode<synchronous>, transform_indices = @transform_14, window_bounds = array<i64: 32, 64>}, {pipeline_mode = #tpu.pipeline_mode<synchronous>, transform_indices = @transform_15, window_bounds = array<i64: 1, 64>}, {pipeline_mode = #tpu.pipeline_mode<synchronous>, transform_indices = @transform_16, window_bounds = array<i64: 64, 32>}, {pipeline_mode = #tpu.pipeline_mode<synchronous>, transform_indices = @transform_17, window_bounds = array<i64: 1, 32>}, {pipeline_mode = #tpu.pipeline_mode<synchronous>, transform_indices = @transform_18, window_bounds = array<i64: 1, 32>}, {pipeline_mode = #tpu.pipeline_mode<synchronous>, transform_indices = @transform_19, window_bounds = array<i64: 1, 32>}, {transform_indices = @transform_20, window_bounds = array<i64: 1, 8, 32>}]} {
    %c0_i32 = arith.constant 0 : i32
    %0 = arith.cmpi eq, %arg1, %c0_i32 : i32
    %1 = arith.extui %0 : i1 to i32
    %c0_i32_0 = arith.constant 0 : i32
    %2 = arith.cmpi ne, %1, %c0_i32_0 : i32
    scf.if %2 {
      %c0_96 = arith.constant 0 : index
      %c0_97 = arith.constant 0 : index
      %c0_98 = arith.constant 0 : index
      %169 = vector.load %arg3[%c0_96, %c0_97, %c0_98] : memref<1x8x32xbf16, #tpu.memory_space<vmem>>, vector<1x8x32xbf16>
      %170 = vector.shape_cast %169 : vector<1x8x32xbf16> to vector<8x32xbf16>
      %c0_99 = arith.constant 0 : index
      %c0_100 = arith.constant 0 : index
      %171 = vector.load %arg8[%c0_99, %c0_100] : memref<32x32xbf16, #tpu.memory_space<vmem>>, vector<32x32xbf16>
      %cst_101 = arith.constant dense<0.000000e+00> : vector<8x32xf32>
      %172 = tpu.matmul %170, %171, %cst_101 {dimension_numbers = #tpu.dot_dimension_numbers<[1], [0], [0], [1], [0, 0, 1, 1], [], []>} : vector<8x32xbf16>, vector<32x32xbf16>, vector<8x32xf32> -> vector<8x32xf32>
      %c0_102 = arith.constant 0 : index
      %c0_103 = arith.constant 0 : index
      %173 = vector.load %arg9[%c0_102, %c0_103] : memref<1x32xf32, #tpu.memory_space<vmem>>, vector<1x32xf32>
      %174 = vector.broadcast %173 : vector<1x32xf32> to vector<8x32xf32>
      %175 = arith.addf %172, %174 : vector<8x32xf32>
      %176 = arith.truncf %175 : vector<8x32xf32> to vector<8x32xbf16>
      %c0_104 = arith.constant 0 : index
      %c0_105 = arith.constant 0 : index
      %177 = vector.load %arg24[%c0_104, %c0_105] : memref<8x32xbf16, #tpu.memory_space<vmem>>, vector<8x32xbf16>
      tpu.vector_store %arg24[%c0_104, %c0_105], %176 {strides = array<i32>} : memref<8x32xbf16, #tpu.memory_space<vmem>>, vector<8x32xbf16>,
      %c0_106 = arith.constant 0 : index
      %c0_107 = arith.constant 0 : index
      %c0_108 = arith.constant 0 : index
      %178 = vector.load %arg4[%c0_106, %c0_107, %c0_108] : memref<1x8x32xbf16, #tpu.memory_space<vmem>>, vector<1x8x32xbf16>
      %179 = vector.shape_cast %178 : vector<1x8x32xbf16> to vector<8x32xbf16>
      %c0_109 = arith.constant 0 : index
      %c0_110 = arith.constant 0 : index
      %180 = vector.load %arg10[%c0_109, %c0_110] : memref<32x32xbf16, #tpu.memory_space<vmem>>, vector<32x32xbf16>
      %cst_111 = arith.constant dense<0.000000e+00> : vector<8x32xf32>
      %181 = tpu.matmul %179, %180, %cst_111 {dimension_numbers = #tpu.dot_dimension_numbers<[1], [0], [0], [1], [0, 0, 1, 1], [], []>} : vector<8x32xbf16>, vector<32x32xbf16>, vector<8x32xf32> -> vector<8x32xf32>
      %c0_112 = arith.constant 0 : index
      %c0_113 = arith.constant 0 : index
      %182 = vector.load %arg11[%c0_112, %c0_113] : memref<1x32xf32, #tpu.memory_space<vmem>>, vector<1x32xf32>
      %183 = vector.broadcast %182 : vector<1x32xf32> to vector<8x32xf32>
      %184 = arith.addf %181, %183 : vector<8x32xf32>
      %185 = arith.truncf %184 : vector<8x32xf32> to vector<8x32xbf16>
      %c0_114 = arith.constant 0 : index
      %c0_115 = arith.constant 0 : index
      %186 = vector.load %arg25[%c0_114, %c0_115] : memref<8x32xbf16, #tpu.memory_space<vmem>>, vector<8x32xbf16>
      tpu.vector_store %arg25[%c0_114, %c0_115], %185 {strides = array<i32>} : memref<8x32xbf16, #tpu.memory_space<vmem>>, vector<8x32xbf16>,
    } else {
    }
    %c0 = arith.constant 0 : index
    %c0_1 = arith.constant 0 : index
    %c0_2 = arith.constant 0 : index
    %3 = vector.load %arg2[%c0, %c0_1, %c0_2] : memref<1x8x32xf32, #tpu.memory_space<vmem>>, vector<1x8x32xf32>
    %4 = vector.shape_cast %3 : vector<1x8x32xf32> to vector<8x32xf32>
    %5 = arith.truncf %4 : vector<8x32xf32> to vector<8x32xbf16>
    %c0_3 = arith.constant 0 : index
    %c0_4 = arith.constant 0 : index
    %6 = vector.load %arg6[%c0_3, %c0_4] : memref<32x32xbf16, #tpu.memory_space<vmem>>, vector<32x32xbf16>
    %cst = arith.constant dense<0.000000e+00> : vector<8x32xf32>
    %7 = tpu.matmul %5, %6, %cst {dimension_numbers = #tpu.dot_dimension_numbers<[1], [0], [0], [1], [0, 0, 1, 1], [], []>} : vector<8x32xbf16>, vector<32x32xbf16>, vector<8x32xf32> -> vector<8x32xf32>
    %c0_5 = arith.constant 0 : index
    %c0_6 = arith.constant 0 : index
    %8 = vector.load %arg7[%c0_5, %c0_6] : memref<1x32xf32, #tpu.memory_space<vmem>>, vector<1x32xf32>
    %9 = vector.broadcast %8 : vector<1x32xf32> to vector<8x32xf32>
    %10 = arith.addf %7, %9 : vector<8x32xf32>
    %11 = arith.truncf %10 : vector<8x32xf32> to vector<8x32xbf16>
    %c0_7 = arith.constant 0 : index
    %c0_8 = arith.constant 0 : index
    %12 = vector.load %arg23[%c0_7, %c0_8] : memref<8x32xbf16, #tpu.memory_space<vmem>>, vector<8x32xbf16>
    tpu.vector_store %arg23[%c0_7, %c0_8], %11 {strides = array<i32>} : memref<8x32xbf16, #tpu.memory_space<vmem>>, vector<8x32xbf16>,
    %c0_9 = arith.constant 0 : index
    %c0_10 = arith.constant 0 : index
    %c0_11 = arith.constant 0 : index
    %13 = vector.load %arg5[%c0_9, %c0_10, %c0_11] : memref<1x8x8xbf16, #tpu.memory_space<vmem>>, vector<1x8x8xbf16>
    %14 = vector.shape_cast %13 : vector<1x8x8xbf16> to vector<8x8xbf16>
    %15 = arith.extf %14 : vector<8x8xbf16> to vector<8x8xf32>
    %c0_12 = arith.constant 0 : index
    %c0_13 = arith.constant 0 : index
    %16 = vector.load %arg23[%c0_12, %c0_13] : memref<8x32xbf16, #tpu.memory_space<vmem>>, vector<8x8xbf16>
    %c0_14 = arith.constant 0 : index
    %c0_15 = arith.constant 0 : index
    %17 = vector.load %arg24[%c0_14, %c0_15] : memref<8x32xbf16, #tpu.memory_space<vmem>>, vector<8x8xbf16>
    %c0_16 = arith.constant 0 : index
    %c0_17 = arith.constant 0 : index
    %18 = vector.load %arg25[%c0_16, %c0_17] : memref<8x32xbf16, #tpu.memory_space<vmem>>, vector<8x8xbf16>
    %cst_18 = arith.constant dense<0.000000e+00> : vector<8x8xf32>
    %19 = tpu.matmul %16, %17, %cst_18 {dimension_numbers = #tpu.dot_dimension_numbers<[1], [1], [0], [0], [0, 0, 1, 0], [], []>} : vector<8x8xbf16>, vector<8x8xbf16>, vector<8x8xf32> -> vector<8x8xf32>
    %20 = arith.addf %19, %15 : vector<8x8xf32>
    %cst_19 = arith.constant dense<0xFF800000> : vector<8xf32>
    %21 = vector.multi_reduction <maximumf>, %20, %cst_19 [1] : vector<8x8xf32> to vector<8xf32>
    %22 = vector.shape_cast %21 : vector<8xf32> to vector<8x1xf32>
    %23 = vector.broadcast %22 : vector<8x1xf32> to vector<8x8xf32>
    %24 = arith.subf %20, %23 : vector<8x8xf32>
    %25 = math.exp %24 : vector<8x8xf32>
    %cst_20 = arith.constant dense<0.000000e+00> : vector<8xf32>
    %26 = vector.multi_reduction <add>, %25, %cst_20 [1] : vector<8x8xf32> to vector<8xf32>
    %27 = vector.shape_cast %26 : vector<8xf32> to vector<8x1xf32>
    %28 = tpu.reciprocal %27 {approx = true} : vector<8x1xf32> -> vector<8x1xf32>
    %29 = vector.broadcast %28 : vector<8x1xf32> to vector<8x8xf32>
    %30 = arith.mulf %25, %29 : vector<8x8xf32>
    %31 = arith.truncf %30 : vector<8x8xf32> to vector<8x8xbf16>
    %cst_21 = arith.constant dense<0.000000e+00> : vector<8x8xf32>
    %32 = tpu.matmul %31, %18, %cst_21 {dimension_numbers = #tpu.dot_dimension_numbers<[1], [0], [0], [1], [0, 0, 1, 1], [], []>} : vector<8x8xbf16>, vector<8x8xbf16>, vector<8x8xf32> -> vector<8x8xf32>
    %33 = arith.truncf %32 : vector<8x8xf32> to vector<8x8xbf16>
    %c0_22 = arith.constant 0 : index
    %c0_23 = arith.constant 0 : index
    %34 = vector.load %arg26[%c0_22, %c0_23] : memref<8x32xbf16, #tpu.memory_space<vmem>>, vector<8x8xbf16>
    tpu.vector_store %arg26[%c0_22, %c0_23], %33 {strides = array<i32>} : memref<8x32xbf16, #tpu.memory_space<vmem>>, vector<8x8xbf16>,
    %c0_24 = arith.constant 0 : index
    %c8 = arith.constant 8 : index
    %35 = vector.load %arg23[%c0_24, %c8] : memref<8x32xbf16, #tpu.memory_space<vmem>>, vector<8x8xbf16>
    %c0_25 = arith.constant 0 : index
    %c8_26 = arith.constant 8 : index
    %36 = vector.load %arg24[%c0_25, %c8_26] : memref<8x32xbf16, #tpu.memory_space<vmem>>, vector<8x8xbf16>
    %c0_27 = arith.constant 0 : index
    %c8_28 = arith.constant 8 : index
    %37 = vector.load %arg25[%c0_27, %c8_28] : memref<8x32xbf16, #tpu.memory_space<vmem>>, vector<8x8xbf16>
    %cst_29 = arith.constant dense<0.000000e+00> : vector<8x8xf32>
    %38 = tpu.matmul %35, %36, %cst_29 {dimension_numbers = #tpu.dot_dimension_numbers<[1], [1], [0], [0], [0, 0, 1, 0], [], []>} : vector<8x8xbf16>, vector<8x8xbf16>, vector<8x8xf32> -> vector<8x8xf32>
    %39 = arith.addf %38, %15 : vector<8x8xf32>
    %cst_30 = arith.constant dense<0xFF800000> : vector<8xf32>
    %40 = vector.multi_reduction <maximumf>, %39, %cst_30 [1] : vector<8x8xf32> to vector<8xf32>
    %41 = vector.shape_cast %40 : vector<8xf32> to vector<8x1xf32>
    %42 = vector.broadcast %41 : vector<8x1xf32> to vector<8x8xf32>
    %43 = arith.subf %39, %42 : vector<8x8xf32>
    %44 = math.exp %43 : vector<8x8xf32>
    %cst_31 = arith.constant dense<0.000000e+00> : vector<8xf32>
    %45 = vector.multi_reduction <add>, %44, %cst_31 [1] : vector<8x8xf32> to vector<8xf32>
    %46 = vector.shape_cast %45 : vector<8xf32> to vector<8x1xf32>
    %47 = tpu.reciprocal %46 {approx = true} : vector<8x1xf32> -> vector<8x1xf32>
    %48 = vector.broadcast %47 : vector<8x1xf32> to vector<8x8xf32>
    %49 = arith.mulf %44, %48 : vector<8x8xf32>
    %50 = arith.truncf %49 : vector<8x8xf32> to vector<8x8xbf16>
    %cst_32 = arith.constant dense<0.000000e+00> : vector<8x8xf32>
    %51 = tpu.matmul %50, %37, %cst_32 {dimension_numbers = #tpu.dot_dimension_numbers<[1], [0], [0], [1], [0, 0, 1, 1], [], []>} : vector<8x8xbf16>, vector<8x8xbf16>, vector<8x8xf32> -> vector<8x8xf32>
    %52 = arith.truncf %51 : vector<8x8xf32> to vector<8x8xbf16>
    %c0_33 = arith.constant 0 : index
    %c8_34 = arith.constant 8 : index
    %53 = vector.load %arg26[%c0_33, %c8_34] : memref<8x32xbf16, #tpu.memory_space<vmem>>, vector<8x8xbf16>
    tpu.vector_store %arg26[%c0_33, %c8_34], %52 {strides = array<i32>} : memref<8x32xbf16, #tpu.memory_space<vmem>>, vector<8x8xbf16>,
    %c0_35 = arith.constant 0 : index
    %c16 = arith.constant 16 : index
    %54 = vector.load %arg23[%c0_35, %c16] : memref<8x32xbf16, #tpu.memory_space<vmem>>, vector<8x8xbf16>
    %c0_36 = arith.constant 0 : index
    %c16_37 = arith.constant 16 : index
    %55 = vector.load %arg24[%c0_36, %c16_37] : memref<8x32xbf16, #tpu.memory_space<vmem>>, vector<8x8xbf16>
    %c0_38 = arith.constant 0 : index
    %c16_39 = arith.constant 16 : index
    %56 = vector.load %arg25[%c0_38, %c16_39] : memref<8x32xbf16, #tpu.memory_space<vmem>>, vector<8x8xbf16>
    %cst_40 = arith.constant dense<0.000000e+00> : vector<8x8xf32>
    %57 = tpu.matmul %54, %55, %cst_40 {dimension_numbers = #tpu.dot_dimension_numbers<[1], [1], [0], [0], [0, 0, 1, 0], [], []>} : vector<8x8xbf16>, vector<8x8xbf16>, vector<8x8xf32> -> vector<8x8xf32>
    %58 = arith.addf %57, %15 : vector<8x8xf32>
    %cst_41 = arith.constant dense<0xFF800000> : vector<8xf32>
    %59 = vector.multi_reduction <maximumf>, %58, %cst_41 [1] : vector<8x8xf32> to vector<8xf32>
    %60 = vector.shape_cast %59 : vector<8xf32> to vector<8x1xf32>
    %61 = vector.broadcast %60 : vector<8x1xf32> to vector<8x8xf32>
    %62 = arith.subf %58, %61 : vector<8x8xf32>
    %63 = math.exp %62 : vector<8x8xf32>
    %cst_42 = arith.constant dense<0.000000e+00> : vector<8xf32>
    %64 = vector.multi_reduction <add>, %63, %cst_42 [1] : vector<8x8xf32> to vector<8xf32>
    %65 = vector.shape_cast %64 : vector<8xf32> to vector<8x1xf32>
    %66 = tpu.reciprocal %65 {approx = true} : vector<8x1xf32> -> vector<8x1xf32>
    %67 = vector.broadcast %66 : vector<8x1xf32> to vector<8x8xf32>
    %68 = arith.mulf %63, %67 : vector<8x8xf32>
    %69 = arith.truncf %68 : vector<8x8xf32> to vector<8x8xbf16>
    %cst_43 = arith.constant dense<0.000000e+00> : vector<8x8xf32>
    %70 = tpu.matmul %69, %56, %cst_43 {dimension_numbers = #tpu.dot_dimension_numbers<[1], [0], [0], [1], [0, 0, 1, 1], [], []>} : vector<8x8xbf16>, vector<8x8xbf16>, vector<8x8xf32> -> vector<8x8xf32>
    %71 = arith.truncf %70 : vector<8x8xf32> to vector<8x8xbf16>
    %c0_44 = arith.constant 0 : index
    %c16_45 = arith.constant 16 : index
    %72 = vector.load %arg26[%c0_44, %c16_45] : memref<8x32xbf16, #tpu.memory_space<vmem>>, vector<8x8xbf16>
    tpu.vector_store %arg26[%c0_44, %c16_45], %71 {strides = array<i32>} : memref<8x32xbf16, #tpu.memory_space<vmem>>, vector<8x8xbf16>,
    %c0_46 = arith.constant 0 : index
    %c24 = arith.constant 24 : index
    %73 = vector.load %arg23[%c0_46, %c24] : memref<8x32xbf16, #tpu.memory_space<vmem>>, vector<8x8xbf16>
    %c0_47 = arith.constant 0 : index
    %c24_48 = arith.constant 24 : index
    %74 = vector.load %arg24[%c0_47, %c24_48] : memref<8x32xbf16, #tpu.memory_space<vmem>>, vector<8x8xbf16>
    %c0_49 = arith.constant 0 : index
    %c24_50 = arith.constant 24 : index
    %75 = vector.load %arg25[%c0_49, %c24_50] : memref<8x32xbf16, #tpu.memory_space<vmem>>, vector<8x8xbf16>
    %cst_51 = arith.constant dense<0.000000e+00> : vector<8x8xf32>
    %76 = tpu.matmul %73, %74, %cst_51 {dimension_numbers = #tpu.dot_dimension_numbers<[1], [1], [0], [0], [0, 0, 1, 0], [], []>} : vector<8x8xbf16>, vector<8x8xbf16>, vector<8x8xf32> -> vector<8x8xf32>
    %77 = arith.addf %76, %15 : vector<8x8xf32>
    %cst_52 = arith.constant dense<0xFF800000> : vector<8xf32>
    %78 = vector.multi_reduction <maximumf>, %77, %cst_52 [1] : vector<8x8xf32> to vector<8xf32>
    %79 = vector.shape_cast %78 : vector<8xf32> to vector<8x1xf32>
    %80 = vector.broadcast %79 : vector<8x1xf32> to vector<8x8xf32>
    %81 = arith.subf %77, %80 : vector<8x8xf32>
    %82 = math.exp %81 : vector<8x8xf32>
    %cst_53 = arith.constant dense<0.000000e+00> : vector<8xf32>
    %83 = vector.multi_reduction <add>, %82, %cst_53 [1] : vector<8x8xf32> to vector<8xf32>
    %84 = vector.shape_cast %83 : vector<8xf32> to vector<8x1xf32>
    %85 = tpu.reciprocal %84 {approx = true} : vector<8x1xf32> -> vector<8x1xf32>
    %86 = vector.broadcast %85 : vector<8x1xf32> to vector<8x8xf32>
    %87 = arith.mulf %82, %86 : vector<8x8xf32>
    %88 = arith.truncf %87 : vector<8x8xf32> to vector<8x8xbf16>
    %cst_54 = arith.constant dense<0.000000e+00> : vector<8x8xf32>
    %89 = tpu.matmul %88, %75, %cst_54 {dimension_numbers = #tpu.dot_dimension_numbers<[1], [0], [0], [1], [0, 0, 1, 1], [], []>} : vector<8x8xbf16>, vector<8x8xbf16>, vector<8x8xf32> -> vector<8x8xf32>
    %90 = arith.truncf %89 : vector<8x8xf32> to vector<8x8xbf16>
    %c0_55 = arith.constant 0 : index
    %c24_56 = arith.constant 24 : index
    %91 = vector.load %arg26[%c0_55, %c24_56] : memref<8x32xbf16, #tpu.memory_space<vmem>>, vector<8x8xbf16>
    tpu.vector_store %arg26[%c0_55, %c24_56], %90 {strides = array<i32>} : memref<8x32xbf16, #tpu.memory_space<vmem>>, vector<8x8xbf16>,
    %c0_57 = arith.constant 0 : index
    %c0_58 = arith.constant 0 : index
    %92 = vector.load %arg26[%c0_57, %c0_58] : memref<8x32xbf16, #tpu.memory_space<vmem>>, vector<8x32xbf16>
    %c0_59 = arith.constant 0 : index
    %c0_60 = arith.constant 0 : index
    %93 = vector.load %arg12[%c0_59, %c0_60] : memref<32x32xbf16, #tpu.memory_space<vmem>>, vector<32x32xbf16>
    %cst_61 = arith.constant dense<0.000000e+00> : vector<8x32xf32>
    %94 = tpu.matmul %92, %93, %cst_61 {dimension_numbers = #tpu.dot_dimension_numbers<[1], [0], [0], [1], [0, 0, 1, 1], [], []>} : vector<8x32xbf16>, vector<32x32xbf16>, vector<8x32xf32> -> vector<8x32xf32>
    %c0_62 = arith.constant 0 : index
    %c0_63 = arith.constant 0 : index
    %95 = vector.load %arg13[%c0_62, %c0_63] : memref<1x32xf32, #tpu.memory_space<vmem>>, vector<1x32xf32>
    %96 = vector.broadcast %95 : vector<1x32xf32> to vector<8x32xf32>
    %97 = arith.addf %94, %96 : vector<8x32xf32>
    %98 = arith.addf %97, %4 : vector<8x32xf32>
    %cst_64 = arith.constant dense<0.000000e+00> : vector<8xf32>
    %99 = vector.multi_reduction <add>, %98, %cst_64 [1] : vector<8x32xf32> to vector<8xf32>
    %100 = vector.shape_cast %99 : vector<8xf32> to vector<8x1xf32>
    %cst_65 = arith.constant 3.200000e+01 : f32
    %101 = vector.broadcast %cst_65 : f32 to vector<8x1xf32>
    %102 = arith.divf %100, %101 : vector<8x1xf32>
    %103 = vector.broadcast %102 : vector<8x1xf32> to vector<8x32xf32>
    %104 = arith.subf %98, %103 : vector<8x32xf32>
    %105 = vector.broadcast %102 : vector<8x1xf32> to vector<8x32xf32>
    %106 = arith.subf %98, %105 : vector<8x32xf32>
    %107 = arith.mulf %104, %106 : vector<8x32xf32>
    %cst_66 = arith.constant dense<0.000000e+00> : vector<8xf32>
    %108 = vector.multi_reduction <add>, %107, %cst_66 [1] : vector<8x32xf32> to vector<8xf32>
    %109 = vector.shape_cast %108 : vector<8xf32> to vector<8x1xf32>
    %cst_67 = arith.constant 3.200000e+01 : f32
    %110 = vector.broadcast %cst_67 : f32 to vector<8x1xf32>
    %111 = arith.divf %109, %110 : vector<8x1xf32>
    %112 = vector.broadcast %102 : vector<8x1xf32> to vector<8x32xf32>
    %113 = arith.subf %98, %112 : vector<8x32xf32>
    %cst_68 = arith.constant 9.99999974E-6 : f32
    %114 = vector.broadcast %cst_68 : f32 to vector<8x1xf32>
    %115 = arith.addf %111, %114 : vector<8x1xf32>
    %116 = math.rsqrt %115 : vector<8x1xf32>
    %117 = vector.broadcast %116 : vector<8x1xf32> to vector<8x32xf32>
    %118 = arith.mulf %113, %117 : vector<8x32xf32>
    %c0_69 = arith.constant 0 : index
    %c0_70 = arith.constant 0 : index
    %119 = vector.load %arg14[%c0_69, %c0_70] : memref<1x32xf32, #tpu.memory_space<vmem>>, vector<1x32xf32>
    %120 = vector.broadcast %119 : vector<1x32xf32> to vector<8x32xf32>
    %121 = arith.mulf %118, %120 : vector<8x32xf32>
    %c0_71 = arith.constant 0 : index
    %c0_72 = arith.constant 0 : index
    %122 = vector.load %arg15[%c0_71, %c0_72] : memref<1x32xf32, #tpu.memory_space<vmem>>, vector<1x32xf32>
    %123 = vector.broadcast %122 : vector<1x32xf32> to vector<8x32xf32>
    %124 = arith.addf %121, %123 : vector<8x32xf32>
    %125 = arith.truncf %124 : vector<8x32xf32> to vector<8x32xbf16>
    %c0_73 = arith.constant 0 : index
    %c0_74 = arith.constant 0 : index
    %126 = vector.load %arg16[%c0_73, %c0_74] : memref<32x64xbf16, #tpu.memory_space<vmem>>, vector<32x64xbf16>
    %cst_75 = arith.constant dense<0.000000e+00> : vector<8x64xf32>
    %127 = tpu.matmul %125, %126, %cst_75 {dimension_numbers = #tpu.dot_dimension_numbers<[1], [0], [0], [1], [0, 0, 1, 1], [], []>} : vector<8x32xbf16>, vector<32x64xbf16>, vector<8x64xf32> -> vector<8x64xf32>
    %c0_76 = arith.constant 0 : index
    %c0_77 = arith.constant 0 : index
    %128 = vector.load %arg17[%c0_76, %c0_77] : memref<1x64xf32, #tpu.memory_space<vmem>>, vector<1x64xf32>
    %129 = vector.broadcast %128 : vector<1x64xf32> to vector<8x64xf32>
    %130 = arith.addf %127, %129 : vector<8x64xf32>
    %cst_78 = arith.constant 0.000000e+00 : f32
    %131 = vector.broadcast %cst_78 : f32 to vector<8x64xf32>
    %132 = arith.maximumf %130, %131 : vector<8x64xf32>
    %133 = arith.truncf %132 : vector<8x64xf32> to vector<8x64xbf16>
    %c0_79 = arith.constant 0 : index
    %c0_80 = arith.constant 0 : index
    %134 = vector.load %arg18[%c0_79, %c0_80] : memref<64x32xbf16, #tpu.memory_space<vmem>>, vector<64x32xbf16>
    %cst_81 = arith.constant dense<0.000000e+00> : vector<8x32xf32>
    %135 = tpu.matmul %133, %134, %cst_81 {dimension_numbers = #tpu.dot_dimension_numbers<[1], [0], [0], [1], [0, 0, 1, 1], [], []>} : vector<8x64xbf16>, vector<64x32xbf16>, vector<8x32xf32> -> vector<8x32xf32>
    %c0_82 = arith.constant 0 : index
    %c0_83 = arith.constant 0 : index
    %136 = vector.load %arg19[%c0_82, %c0_83] : memref<1x32xf32, #tpu.memory_space<vmem>>, vector<1x32xf32>
    %137 = vector.broadcast %136 : vector<1x32xf32> to vector<8x32xf32>
    %138 = arith.addf %135, %137 : vector<8x32xf32>
    %139 = arith.addf %138, %124 : vector<8x32xf32>
    %cst_84 = arith.constant dense<0.000000e+00> : vector<8xf32>
    %140 = vector.multi_reduction <add>, %139, %cst_84 [1] : vector<8x32xf32> to vector<8xf32>
    %141 = vector.shape_cast %140 : vector<8xf32> to vector<8x1xf32>
    %cst_85 = arith.constant 3.200000e+01 : f32
    %142 = vector.broadcast %cst_85 : f32 to vector<8x1xf32>
    %143 = arith.divf %141, %142 : vector<8x1xf32>
    %144 = vector.broadcast %143 : vector<8x1xf32> to vector<8x32xf32>
    %145 = arith.subf %139, %144 : vector<8x32xf32>
    %146 = vector.broadcast %143 : vector<8x1xf32> to vector<8x32xf32>
    %147 = arith.subf %139, %146 : vector<8x32xf32>
    %148 = arith.mulf %145, %147 : vector<8x32xf32>
    %cst_86 = arith.constant dense<0.000000e+00> : vector<8xf32>
    %149 = vector.multi_reduction <add>, %148, %cst_86 [1] : vector<8x32xf32> to vector<8xf32>
    %150 = vector.shape_cast %149 : vector<8xf32> to vector<8x1xf32>
    %cst_87 = arith.constant 3.200000e+01 : f32
    %151 = vector.broadcast %cst_87 : f32 to vector<8x1xf32>
    %152 = arith.divf %150, %151 : vector<8x1xf32>
    %153 = vector.broadcast %143 : vector<8x1xf32> to vector<8x32xf32>
    %154 = arith.subf %139, %153 : vector<8x32xf32>
    %cst_88 = arith.constant 9.99999974E-6 : f32
    %155 = vector.broadcast %cst_88 : f32 to vector<8x1xf32>
    %156 = arith.addf %152, %155 : vector<8x1xf32>
    %157 = math.rsqrt %156 : vector<8x1xf32>
    %158 = vector.broadcast %157 : vector<8x1xf32> to vector<8x32xf32>
    %159 = arith.mulf %154, %158 : vector<8x32xf32>
    %c0_89 = arith.constant 0 : index
    %c0_90 = arith.constant 0 : index
    %160 = vector.load %arg20[%c0_89, %c0_90] : memref<1x32xf32, #tpu.memory_space<vmem>>, vector<1x32xf32>
    %161 = vector.broadcast %160 : vector<1x32xf32> to vector<8x32xf32>
    %162 = arith.mulf %159, %161 : vector<8x32xf32>
    %c0_91 = arith.constant 0 : index
    %c0_92 = arith.constant 0 : index
    %163 = vector.load %arg21[%c0_91, %c0_92] : memref<1x32xf32, #tpu.memory_space<vmem>>, vector<1x32xf32>
    %164 = vector.broadcast %163 : vector<1x32xf32> to vector<8x32xf32>
    %165 = arith.addf %162, %164 : vector<8x32xf32>
    %c0_93 = arith.constant 0 : index
    %c0_94 = arith.constant 0 : index
    %c0_95 = arith.constant 0 : index
    %166 = vector.load %arg22[%c0_93, %c0_94, %c0_95] : memref<1x8x32xf32, #tpu.memory_space<vmem>>, vector<1x8x32xf32>
    %167 = vector.shape_cast %166 : vector<1x8x32xf32> to vector<8x32xf32>
    %168 = vector.shape_cast %165 : vector<8x32xf32> to vector<1x8x32xf32>
    tpu.vector_store %arg22[%c0_93, %c0_94, %c0_95], %168 {strides = array<i32>} : memref<1x8x32xf32, #tpu.memory_space<vmem>>, vector<1x8x32xf32>,
    return
  }
  func.func @transform_0(%arg0: i32, %arg1: i32) -> (i32, i32, i32) {
    %c0_i32 = arith.constant 0 : i32
    %c0_i32_0 = arith.constant 0 : i32
    return %arg0, %arg1, %c0_i32 : i32, i32, i32
  }
  func.func @transform_1(%arg0: i32, %arg1: i32) -> (i32, i32, i32) {
    %c0_i32 = arith.constant 0 : i32
    %c0_i32_0 = arith.constant 0 : i32
    %c0_i32_1 = arith.constant 0 : i32
    return %arg0, %c0_i32, %c0_i32_0 : i32, i32, i32
  }
  func.func @transform_2(%arg0: i32, %arg1: i32) -> (i32, i32, i32) {
    %c0_i32 = arith.constant 0 : i32
    %c0_i32_0 = arith.constant 0 : i32
    %c0_i32_1 = arith.constant 0 : i32
    return %arg0, %c0_i32, %c0_i32_0 : i32, i32, i32
  }
  func.func @transform_3(%arg0: i32, %arg1: i32) -> (i32, i32, i32) {
    %c0_i32 = arith.constant 0 : i32
    %c0_i32_0 = arith.constant 0 : i32
    return %arg0, %arg1, %c0_i32 : i32, i32, i32
  }
  func.func @transform_4(%arg0: i32, %arg1: i32) -> (i32, i32) {
    %c0_i32 = arith.constant 0 : i32
    %c0_i32_0 = arith.constant 0 : i32
    %c0_i32_1 = arith.constant 0 : i32
    return %c0_i32, %c0_i32_0 : i32, i32
  }
  func.func @transform_5(%arg0: i32, %arg1: i32) -> (i32, i32) {
    %c0_i32 = arith.constant 0 : i32
    %c0_i32_0 = arith.constant 0 : i32
    %c0_i32_1 = arith.constant 0 : i32
    return %c0_i32, %c0_i32_0 : i32, i32
  }
  func.func @transform_6(%arg0: i32, %arg1: i32) -> (i32, i32) {
    %c0_i32 = arith.constant 0 : i32
    %c0_i32_0 = arith.constant 0 : i32
    %c0_i32_1 = arith.constant 0 : i32
    return %c0_i32, %c0_i32_0 : i32, i32
  }
  func.func @transform_7(%arg0: i32, %arg1: i32) -> (i32, i32) {
    %c0_i32 = arith.constant 0 : i32
    %c0_i32_0 = arith.constant 0 : i32
    %c0_i32_1 = arith.constant 0 : i32
    return %c0_i32, %c0_i32_0 : i32, i32
  }
  func.func @transform_8(%arg0: i32, %arg1: i32) -> (i32, i32) {
    %c0_i32 = arith.constant 0 : i32
    %c0_i32_0 = arith.constant 0 : i32
    %c0_i32_1 = arith.constant 0 : i32
    return %c0_i32, %c0_i32_0 : i32, i32
  }
  func.func @transform_9(%arg0: i32, %arg1: i32) -> (i32, i32) {
    %c0_i32 = arith.constant 0 : i32
    %c0_i32_0 = arith.constant 0 : i32
    %c0_i32_1 = arith.constant 0 : i32
    return %c0_i32, %c0_i32_0 : i32, i32
  }
  func.func @transform_10(%arg0: i32, %arg1: i32) -> (i32, i32) {
    %c0_i32 = arith.constant 0 : i32
    %c0_i32_0 = arith.constant 0 : i32
    %c0_i32_1 = arith.constant 0 : i32
    return %c0_i32, %c0_i32_0 : i32, i32
  }
  func.func @transform_11(%arg0: i32, %arg1: i32) -> (i32, i32) {
    %c0_i32 = arith.constant 0 : i32
    %c0_i32_0 = arith.constant 0 : i32
    %c0_i32_1 = arith.constant 0 : i32
    return %c0_i32, %c0_i32_0 : i32, i32
  }
  func.func @transform_12(%arg0: i32, %arg1: i32) -> (i32, i32) {
    %c0_i32 = arith.constant 0 : i32
    %c0_i32_0 = arith.constant 0 : i32
    %c0_i32_1 = arith.constant 0 : i32
    return %c0_i32, %c0_i32_0 : i32, i32
  }
  func.func @transform_13(%arg0: i32, %arg1: i32) -> (i32, i32) {
    %c0_i32 = arith.constant 0 : i32
    %c0_i32_0 = arith.constant 0 : i32
    %c0_i32_1 = arith.constant 0 : i32
    return %c0_i32, %c0_i32_0 : i32, i32
  }
  func.func @transform_14(%arg0: i32, %arg1: i32) -> (i32, i32) {
    %c0_i32 = arith.constant 0 : i32
    %c0_i32_0 = arith.constant 0 : i32
    %c0_i32_1 = arith.constant 0 : i32
    return %c0_i32, %c0_i32_0 : i32, i32
  }
  func.func @transform_15(%arg0: i32, %arg1: i32) -> (i32, i32) {
    %c0_i32 = arith.constant 0 : i32
    %c0_i32_0 = arith.constant 0 : i32
    %c0_i32_1 = arith.constant 0 : i32
    return %c0_i32, %c0_i32_0 : i32, i32
  }
  func.func @transform_16(%arg0: i32, %arg1: i32) -> (i32, i32) {
    %c0_i32 = arith.constant 0 : i32
    %c0_i32_0 = arith.constant 0 : i32
    %c0_i32_1 = arith.constant 0 : i32
    return %c0_i32, %c0_i32_0 : i32, i32
  }
  func.func @transform_17(%arg0: i32, %arg1: i32) -> (i32, i32) {
    %c0_i32 = arith.constant 0 : i32
    %c0_i32_0 = arith.constant 0 : i32
    %c0_i32_1 = arith.constant 0 : i32
    return %c0_i32, %c0_i32_0 : i32, i32
  }
  func.func @transform_18(%arg0: i32, %arg1: i32) -> (i32, i32) {
    %c0_i32 = arith.constant 0 : i32
    %c0_i32_0 = arith.constant 0 : i32
    %c0_i32_1 = arith.constant 0 : i32
    return %c0_i32, %c0_i32_0 : i32, i32
  }
  func.func @transform_19(%arg0: i32, %arg1: i32) -> (i32, i32) {
    %c0_i32 = arith.constant 0 : i32
    %c0_i32_0 = arith.constant 0 : i32
    %c0_i32_1 = arith.constant 0 : i32
    return %c0_i32, %c0_i32_0 : i32, i32
  }
  func.func @transform_20(%arg0: i32, %arg1: i32) -> (i32, i32, i32) {
    %c0_i32 = arith.constant 0 : i32
    %c0_i32_0 = arith.constant 0 : i32
    return %arg0, %arg1, %c0_i32 : i32, i32, i32
  }
}

</mosaic_0001>

<llo_original>
// kernel: tpu_custom_call.1
$region0: #{tpu_custom_call.1}
  #allocation0 [shape = 'u32[]', space=smem, size = 0x4, offset = 0x4, fixed_abs, tag = 'smem constant byte address 0x4 - core index']
  #allocation1 [shape = 'u32[144,128]{1,0:T(1,128)}', space=vmem, size = 0x12000, scoped, tag = 'internal scratch']
  #allocation2 [shape = 'bf16[8,32]{1,0:T(8,128)(2,1)}', space=vmem, size = 0x800, scoped, tag = 'scratch operand']
  #allocation3 [shape = 'bf16[8,32]{1,0:T(8,128)(2,1)}', space=vmem, size = 0x800, scoped, tag = 'scratch operand']
  #allocation4 [shape = 'bf16[8,32]{1,0:T(8,128)(2,1)}', space=vmem, size = 0x800, scoped, tag = 'scratch operand']
  #allocation5 [shape = 'bf16[8,32]{1,0:T(8,128)(2,1)}', space=vmem, size = 0x800, scoped, tag = 'scratch operand']
  %s0 = inlined_call_operand.vmem [shape: f32[2,8,32], index: 0, kind: input, shape index: {}]
  %s1 = inlined_call_operand.hbm [shape: bf16[2,8,32], index: 1, kind: input, shape index: {}]
  %s2 = inlined_call_operand.hbm [shape: bf16[2,8,32], index: 2, kind: input, shape index: {}]
  %s3 = inlined_call_operand.hbm [shape: bf16[2,8,8], index: 3, kind: input, shape index: {}]
  %s4 = inlined_call_operand.vmem [shape: bf16[32,32], index: 4, kind: input, shape index: {}]
  %s5 = inlined_call_operand.hbm [shape: f32[1,32], index: 5, kind: input, shape index: {}]
  %s6 = inlined_call_operand.vmem [shape: bf16[32,32], index: 6, kind: input, shape index: {}]
  %s7 = inlined_call_operand.hbm [shape: f32[1,32], index: 7, kind: input, shape index: {}]
  %s8 = inlined_call_operand.hbm [shape: bf16[32,32], index: 8, kind: input, shape index: {}]
  %s9 = inlined_call_operand.hbm [shape: f32[1,32], index: 9, kind: input, shape index: {}]
  %s10 = inlined_call_operand.vmem [shape: bf16[32,32], index: 10, kind: input, shape index: {}]
  %s11 = inlined_call_operand.vmem [shape: f32[1,32], index: 11, kind: input, shape index: {}]
  %s12 = inlined_call_operand.vmem [shape: f32[1,32], index: 12, kind: input, shape index: {}]
  %s13 = inlined_call_operand.vmem [shape: f32[1,32], index: 13, kind: input, shape index: {}]
  %s14 = inlined_call_operand.hbm [shape: bf16[32,64], index: 14, kind: input, shape index: {}]
  %s15 = inlined_call_operand.vmem [shape: f32[1,64], index: 15, kind: input, shape index: {}]
  %s16 = inlined_call_operand.vmem [shape: bf16[64,32], index: 16, kind: input, shape index: {}]
  %s17 = inlined_call_operand.vmem [shape: f32[1,32], index: 17, kind: input, shape index: {}]
  %s18 = inlined_call_operand.vmem [shape: f32[1,32], index: 18, kind: input, shape index: {}]
  %s19 = inlined_call_operand.vmem [shape: f32[1,32], index: 19, kind: input, shape index: {}]
  %s20 = inlined_call_operand.hbm [shape: f32[2,8,32], index: 20, kind: output, shape index: {}]
  %s21 = sld [smem:[#allocation0]]
  $region149: #{tpu_custom_call.1} parent=0
    _
  %s23 = ssub.s32 1, %s21
  %s24 = scalar_select 0, %s23, %s21
  $region1: #{tpu_custom_call.1} parent=0
    #allocation6 [shape = 'u8[4096]{0}', space=vmem, size = 0x1000, scoped, tag = 'input window, operand 1']
    #allocation7 [shape = 's32[2]{0}', space=sflag, size = 0x8, scoped, tag = 'scoped memory for tpu_custom_call.1']
    #allocation8 [shape = 's32[2]{0}', space=sflag, size = 0x8, scoped, tag = 'scoped memory for tpu_custom_call.1']
    #allocation9 [shape = 'u8[4096]{0}', space=vmem, size = 0x1000, scoped, tag = 'input window, operand 2']
    #allocation10 [shape = 's32[2]{0}', space=sflag, size = 0x8, scoped, tag = 'scoped memory for tpu_custom_call.1']
    #allocation11 [shape = 'u8[4096]{0}', space=vmem, size = 0x1000, scoped, tag = 'input window, operand 3']
    #allocation12 [shape = 'u8[512]{0}', space=vmem, size = 0x400, scoped, tag = 'input window, operand 5, single buffered']
    #allocation13 [shape = 's32[1]{0}', space=sflag, size = 0x4, scoped, tag = 'scoped memory for tpu_custom_call.1']
    #allocation14 [shape = 'u8[512]{0}', space=vmem, size = 0x400, scoped, tag = 'input window, operand 7, single buffered']
    #allocation15 [shape = 'u8[8192]{0}', space=vmem, size = 0x2000, scoped, tag = 'input window, operand 8, single buffered']
    #allocation16 [shape = 's32[1]{0}', space=sflag, size = 0x4, scoped, tag = 'scoped memory for tpu_custom_call.1']
    #allocation17 [shape = 'u8[512]{0}', space=vmem, size = 0x400, scoped, tag = 'input window, operand 9, single buffered']
    #allocation18 [shape = 'u8[8192]{0}', space=vmem, size = 0x2000, scoped, tag = 'input window, operand 14, single buffered']
    #allocation19 [shape = 's32[1]{0}', space=sflag, size = 0x4, scoped, tag = 'scoped memory for tpu_custom_call.1']
    #allocation20 [shape = 'u8[8192]{0}', space=vmem, size = 0x2000, scoped, tag = 'output window, operand 0']
    %25 = vsyncpa [#allocation7], 0
    %s26 = scalar_lea.sflag [#allocation7], 1
    %27 = vsyncpa %s26, 0
    %28 = vsyncpa [#allocation10], 0
    %s29 = scalar_lea.sflag [#allocation10], 1
    %30 = vsyncpa %s29, 0
    %31 = vsyncpa [#allocation13], 0
    %32 = vsyncpa [#allocation16], 0
    %33 = vsyncpa [#allocation19], 0
    %34 = vsyncpa [#allocation8], 0
    %s35 = scalar_lea.sflag [#allocation8], 1
    %36 = vsyncpa %s35, 0
    loop: start=0, step=1, limit=4
    $region2: #{tpu_custom_call.1} parent=1 // loop_pre_header
      _
    $region3: #{tpu_custom_call.1} parent=1 // loop_header
      %s38 = sphi 0, %s42
      %p39 = scmp.ge.s32.totalorder %s38, 4
      %s45 = sphi 0, %s57
      %s46 = sphi 0, %s53
      %s47 = sphi 0, %s45
      %s48 = sphi 0, %s46
      %s49 = sphi 0, %s47
      %s50 = sphi 0, %s48
      %s62 = sphi 0, %s64
      %s65 = sphi 0, %s62
      %s66 = sphi 0, %s65
      %s82 = sphi 0, %s66
      %s88 = sphi 0, %s90
      %s91 = sphi 0, %s88
      %s92 = sphi 0, %s91
      %s108 = sphi 0, %s92
      %s114 = sphi 0, %s116
      %s117 = sphi 0, %s114
      %s118 = sphi 0, %s117
      %s134 = sphi 0, %s118
      %s142 = sphi 0, %s144
      %s145 = sphi 0, %s142
      %s146 = sphi 0, %s145
      %s162 = sphi 0, %s146
      %s166 = sphi 0, %s166
      %s168 = sphi 0, %s166
      %s169 = sphi 0, %s168
      %s183 = sphi 0, %s169
      %s187 = sphi 0, %s187
      %s189 = sphi 0, %s187
      %s190 = sphi 0, %s189
      %s204 = sphi 0, %s190
      %s208 = sphi 0, %s208
      %s210 = sphi 0, %s208
      %s211 = sphi 0, %s210
      %s225 = sphi 0, %s211
      %s229 = sphi 0, %s229
      %s231 = sphi 0, %s229
      %s232 = sphi 0, %s231
      %s246 = sphi 0, %s232
      %s250 = sphi 0, %s250
      %s252 = sphi 0, %s250
      %s253 = sphi 0, %s252
      %s267 = sphi 0, %s253
      %s271 = sphi 0, %s271
      %s273 = sphi 0, %s271
      %s274 = sphi 0, %s273
      %s288 = sphi 0, %s274
      %s292 = sphi 0, %s292
      %s294 = sphi 0, %s292
      %s295 = sphi 0, %s294
      %s309 = sphi 0, %s295
      %s313 = sphi 0, %s313
      %s315 = sphi 0, %s313
      %s316 = sphi 0, %s315
      %s330 = sphi 0, %s316
      %s334 = sphi 0, %s334
      %s336 = sphi 0, %s334
      %s337 = sphi 0, %s336
      %s351 = sphi 0, %s337
      %s355 = sphi 0, %s355
      %s357 = sphi 0, %s355
      %s358 = sphi 0, %s357
      %s372 = sphi 0, %s358
      %s376 = sphi 0, %s376
      %s378 = sphi 0, %s376
      %s379 = sphi 0, %s378
      %s393 = sphi 0, %s379
      %s397 = sphi 0, %s397
      %s399 = sphi 0, %s397
      %s400 = sphi 0, %s399
      %s414 = sphi 0, %s400
      %s418 = sphi 0, %s418
      %s420 = sphi 0, %s418
      %s421 = sphi 0, %s420
      %s435 = sphi 0, %s421
      %s439 = sphi 0, %s439
      %s441 = sphi 0, %s439
      %s442 = sphi 0, %s441
      %s456 = sphi 0, %s442
      %s460 = sphi 0, %s460
      %s462 = sphi 0, %s460
      %s463 = sphi 0, %s462
      %s477 = sphi 0, %s463
      %s481 = sphi 0, %s481
      %s483 = sphi 0, %s481
      %s484 = sphi 0, %s483
      %s498 = sphi 0, %s484
      %s506 = sphi 0, %s508
      %s509 = sphi 0, %s506
      %s510 = sphi 0, %s509
      %s526 = sphi 0, %s510
    $region4: #{tpu_custom_call.1} parent=1 // loop_header_branch
      %41 = sbr.rel (%p39) target = $region8
    $region5: #{tpu_custom_call.1} parent=1 // loop_body
      %s43 = ssub.s32 %s38, 1
      %s44 = ssub.s32 %s38, 2
      %s51 = sadd.s32 1, %s46
      %p52 = scmp.ge.s32.totalorder %s51, 1
      %s53 = scalar_select %p52, 0, %s51
      %s54 = sadd.s32 1, %s45
      %s55 = scalar_select %p52, %s54, %s45
      %p56 = scmp.ge.s32.totalorder %s55, 2
      %s57 = scalar_select %p56, 0, %s55
      %s58 = ssub.s32 %s45, %s57
      %s59 = ssub.s32 %s46, %s53
      %s60 = sor.u32 %s58, %s59
      %p61 = scmp.eq.s32.totalorder %s60, 0
      %s63 = sadd.s32 %s62, 1
      %s64 = scalar_select %p61, %s62, %s63
      %p67 = pneg %p61
      %p68 = scmp.eq.s32.totalorder %s38, 1
      %p69 = por %p67, %p68
      %p70 = scmp.ne.s32.totalorder %s62, %s65
      %p71 = scmp.eq.s32.totalorder %s38, 0
      %p72 = por %p70, %p71
      %p73 = scmp.ne.s32.totalorder %s62, %s65
      %p74 = scmp.eq.s32.totalorder %s43, 1
      %p75 = por %p73, %p74
      %p76 = scmp.ne.s32.totalorder %s65, %s66
      %p77 = scmp.eq.s32.totalorder %s43, 0
      %p78 = por %p76, %p77
      %p79 = scmp.ne.s32.totalorder %s65, %s66
      %p80 = scmp.eq.s32.totalorder %s44, 1
      %p81 = por %p79, %p80
      %p83 = scmp.ne.s32.totalorder %s66, %s82
      %p84 = scmp.eq.s32.totalorder %s44, 0
      %p85 = por %p83, %p84
      %s86 = ssub.s32 %s45, %s57
      %p87 = scmp.eq.s32.totalorder %s86, 0
      %s89 = sadd.s32 %s88, 1
      %s90 = scalar_select %p87, %s88, %s89
      %p93 = pneg %p87
      %p94 = scmp.eq.s32.totalorder %s38, 1
      %p95 = por %p93, %p94
      %p96 = scmp.ne.s32.totalorder %s88, %s91
      %p97 = scmp.eq.s32.totalorder %s38, 0
      %p98 = por %p96, %p97
      %p99 = scmp.ne.s32.totalorder %s88, %s91
      %p100 = scmp.eq.s32.totalorder %s43, 1
      %p101 = por %p99, %p100
      %p102 = scmp.ne.s32.totalorder %s91, %s92
      %p103 = scmp.eq.s32.totalorder %s43, 0
      %p104 = por %p102, %p103
      %p105 = scmp.ne.s32.totalorder %s91, %s92
      %p106 = scmp.eq.s32.totalorder %s44, 1
      %p107 = por %p105, %p106
      %p109 = scmp.ne.s32.totalorder %s92, %s108
      %p110 = scmp.eq.s32.totalorder %s44, 0
      %p111 = por %p109, %p110
      %s112 = ssub.s32 %s45, %s57
      %p113 = scmp.eq.s32.totalorder %s112, 0
      %s115 = sadd.s32 %s114, 1
      %s116 = scalar_select %p113, %s114, %s115
      %p119 = pneg %p113
      %p120 = scmp.eq.s32.totalorder %s38, 1
      %p121 = por %p119, %p120
      %p122 = scmp.ne.s32.totalorder %s114, %s117
      %p123 = scmp.eq.s32.totalorder %s38, 0
      %p124 = por %p122, %p123
      %p125 = scmp.ne.s32.totalorder %s114, %s117
      %p126 = scmp.eq.s32.totalorder %s43, 1
      %p127 = por %p125, %p126
      %p128 = scmp.ne.s32.totalorder %s117, %s118
      %p129 = scmp.eq.s32.totalorder %s43, 0
      %p130 = por %p128, %p129
      %p131 = scmp.ne.s32.totalorder %s117, %s118
      %p132 = scmp.eq.s32.totalorder %s44, 1
      %p133 = por %p131, %p132
      %p135 = scmp.ne.s32.totalorder %s118, %s134
      %p136 = scmp.eq.s32.totalorder %s44, 0
      %p137 = por %p135, %p136
      %s138 = ssub.s32 %s45, %s57
      %s139 = ssub.s32 %s46, %s53
      %s140 = sor.u32 %s138, %s139
      %p141 = scmp.eq.s32.totalorder %s140, 0
      %s143 = sadd.s32 %s142, 1
      %s144 = scalar_select %p141, %s142, %s143
      %p147 = pneg %p141
      %p148 = scmp.eq.s32.totalorder %s38, 1
      %p149 = por %p147, %p148
      %p150 = scmp.ne.s32.totalorder %s142, %s145
      %p151 = scmp.eq.s32.totalorder %s38, 0
      %p152 = por %p150, %p151
      %p153 = scmp.ne.s32.totalorder %s142, %s145
      %p154 = scmp.eq.s32.totalorder %s43, 1
      %p155 = por %p153, %p154
      %p156 = scmp.ne.s32.totalorder %s145, %s146
      %p157 = scmp.eq.s32.totalorder %s43, 0
      %p158 = por %p156, %p157
      %p159 = scmp.ne.s32.totalorder %s145, %s146
      %p160 = scmp.eq.s32.totalorder %s44, 1
      %p161 = por %p159, %p160
      %p163 = scmp.ne.s32.totalorder %s146, %s162
      %p164 = scmp.eq.s32.totalorder %s44, 0
      %p165 = por %p163, %p164
      %s167 = sadd.s32 %s166, 1
      %p170 = scmp.eq.s32.totalorder %s38, 1
      %p171 = scmp.ne.s32.totalorder %s166, %s168
      %p172 = scmp.eq.s32.totalorder %s38, 0
      %p173 = por %p171, %p172
      %p174 = scmp.ne.s32.totalorder %s166, %s168
      %p175 = scmp.eq.s32.totalorder %s43, 1
      %p176 = por %p174, %p175
      %p177 = scmp.ne.s32.totalorder %s168, %s169
      %p178 = scmp.eq.s32.totalorder %s43, 0
      %p179 = por %p177, %p178
      %p180 = scmp.ne.s32.totalorder %s168, %s169
      %p181 = scmp.eq.s32.totalorder %s44, 1
      %p182 = por %p180, %p181
      %p184 = scmp.ne.s32.totalorder %s169, %s183
      %p185 = scmp.eq.s32.totalorder %s44, 0
      %p186 = por %p184, %p185
      %s188 = sadd.s32 %s187, 1
      %p191 = scmp.eq.s32.totalorder %s38, 1
      %p192 = scmp.ne.s32.totalorder %s187, %s189
      %p193 = scmp.eq.s32.totalorder %s38, 0
      %p194 = por %p192, %p193
      %p195 = scmp.ne.s32.totalorder %s187, %s189
      %p196 = scmp.eq.s32.totalorder %s43, 1
      %p197 = por %p195, %p196
      %p198 = scmp.ne.s32.totalorder %s189, %s190
      %p199 = scmp.eq.s32.totalorder %s43, 0
      %p200 = por %p198, %p199
      %p201 = scmp.ne.s32.totalorder %s189, %s190
      %p202 = scmp.eq.s32.totalorder %s44, 1
      %p203 = por %p201, %p202
      %p205 = scmp.ne.s32.totalorder %s190, %s204
      %p206 = scmp.eq.s32.totalorder %s44, 0
      %p207 = por %p205, %p206
      %s209 = sadd.s32 %s208, 1
      %p212 = scmp.eq.s32.totalorder %s38, 1
      %p213 = scmp.ne.s32.totalorder %s208, %s210
      %p214 = scmp.eq.s32.totalorder %s38, 0
      %p215 = por %p213, %p214
      %p216 = scmp.ne.s32.totalorder %s208, %s210
      %p217 = scmp.eq.s32.totalorder %s43, 1
      %p218 = por %p216, %p217
      %p219 = scmp.ne.s32.totalorder %s210, %s211
      %p220 = scmp.eq.s32.totalorder %s43, 0
      %p221 = por %p219, %p220
      %p222 = scmp.ne.s32.totalorder %s210, %s211
      %p223 = scmp.eq.s32.totalorder %s44, 1
      %p224 = por %p222, %p223
      %p226 = scmp.ne.s32.totalorder %s211, %s225
      %p227 = scmp.eq.s32.totalorder %s44, 0
      %p228 = por %p226, %p227
      %s230 = sadd.s32 %s229, 1
      %p233 = scmp.eq.s32.totalorder %s38, 1
      %p234 = scmp.ne.s32.totalorder %s229, %s231
      %p235 = scmp.eq.s32.totalorder %s38, 0
      %p236 = por %p234, %p235
      %p237 = scmp.ne.s32.totalorder %s229, %s231
      %p238 = scmp.eq.s32.totalorder %s43, 1
      %p239 = por %p237, %p238
      %p240 = scmp.ne.s32.totalorder %s231, %s232
      %p241 = scmp.eq.s32.totalorder %s43, 0
      %p242 = por %p240, %p241
      %p243 = scmp.ne.s32.totalorder %s231, %s232
      %p244 = scmp.eq.s32.totalorder %s44, 1
      %p245 = por %p243, %p244
      %p247 = scmp.ne.s32.totalorder %s232, %s246
      %p248 = scmp.eq.s32.totalorder %s44, 0
      %p249 = por %p247, %p248
      %s251 = sadd.s32 %s250, 1
      %p254 = scmp.eq.s32.totalorder %s38, 1
      %p255 = scmp.ne.s32.totalorder %s250, %s252
      %p256 = scmp.eq.s32.totalorder %s38, 0
      %p257 = por %p255, %p256
      %p258 = scmp.ne.s32.totalorder %s250, %s252
      %p259 = scmp.eq.s32.totalorder %s43, 1
      %p260 = por %p258, %p259
      %p261 = scmp.ne.s32.totalorder %s252, %s253
      %p262 = scmp.eq.s32.totalorder %s43, 0
      %p263 = por %p261, %p262
      %p264 = scmp.ne.s32.totalorder %s252, %s253
      %p265 = scmp.eq.s32.totalorder %s44, 1
      %p266 = por %p264, %p265
      %p268 = scmp.ne.s32.totalorder %s253, %s267
      %p269 = scmp.eq.s32.totalorder %s44, 0
      %p270 = por %p268, %p269
      %s272 = sadd.s32 %s271, 1
      %p275 = scmp.eq.s32.totalorder %s38, 1
      %p276 = scmp.ne.s32.totalorder %s271, %s273
      %p277 = scmp.eq.s32.totalorder %s38, 0
      %p278 = por %p276, %p277
      %p279 = scmp.ne.s32.totalorder %s271, %s273
      %p280 = scmp.eq.s32.totalorder %s43, 1
      %p281 = por %p279, %p280
      %p282 = scmp.ne.s32.totalorder %s273, %s274
      %p283 = scmp.eq.s32.totalorder %s43, 0
      %p284 = por %p282, %p283
      %p285 = scmp.ne.s32.totalorder %s273, %s274
      %p286 = scmp.eq.s32.totalorder %s44, 1
      %p287 = por %p285, %p286
      %p289 = scmp.ne.s32.totalorder %s274, %s288
      %p290 = scmp.eq.s32.totalorder %s44, 0
      %p291 = por %p289, %p290
      %s293 = sadd.s32 %s292, 1
      %p296 = scmp.eq.s32.totalorder %s38, 1
      %p297 = scmp.ne.s32.totalorder %s292, %s294
      %p298 = scmp.eq.s32.totalorder %s38, 0
      %p299 = por %p297, %p298
      %p300 = scmp.ne.s32.totalorder %s292, %s294
      %p301 = scmp.eq.s32.totalorder %s43, 1
      %p302 = por %p300, %p301
      %p303 = scmp.ne.s32.totalorder %s294, %s295
      %p304 = scmp.eq.s32.totalorder %s43, 0
      %p305 = por %p303, %p304
      %p306 = scmp.ne.s32.totalorder %s294, %s295
      %p307 = scmp.eq.s32.totalorder %s44, 1
      %p308 = por %p306, %p307
      %p310 = scmp.ne.s32.totalorder %s295, %s309
      %p311 = scmp.eq.s32.totalorder %s44, 0
      %p312 = por %p310, %p311
      %s314 = sadd.s32 %s313, 1
      %p317 = scmp.eq.s32.totalorder %s38, 1
      %p318 = scmp.ne.s32.totalorder %s313, %s315
      %p319 = scmp.eq.s32.totalorder %s38, 0
      %p320 = por %p318, %p319
      %p321 = scmp.ne.s32.totalorder %s313, %s315
      %p322 = scmp.eq.s32.totalorder %s43, 1
      %p323 = por %p321, %p322
      %p324 = scmp.ne.s32.totalorder %s315, %s316
      %p325 = scmp.eq.s32.totalorder %s43, 0
      %p326 = por %p324, %p325
      %p327 = scmp.ne.s32.totalorder %s315, %s316
      %p328 = scmp.eq.s32.totalorder %s44, 1
      %p329 = por %p327, %p328
      %p331 = scmp.ne.s32.totalorder %s316, %s330
      %p332 = scmp.eq.s32.totalorder %s44, 0
      %p333 = por %p331, %p332
      %s335 = sadd.s32 %s334, 1
      %p338 = scmp.eq.s32.totalorder %s38, 1
      %p339 = scmp.ne.s32.totalorder %s334, %s336
      %p340 = scmp.eq.s32.totalorder %s38, 0
      %p341 = por %p339, %p340
      %p342 = scmp.ne.s32.totalorder %s334, %s336
      %p343 = scmp.eq.s32.totalorder %s43, 1
      %p344 = por %p342, %p343
      %p345 = scmp.ne.s32.totalorder %s336, %s337
      %p346 = scmp.eq.s32.totalorder %s43, 0
      %p347 = por %p345, %p346
      %p348 = scmp.ne.s32.totalorder %s336, %s337
      %p349 = scmp.eq.s32.totalorder %s44, 1
      %p350 = por %p348, %p349
      %p352 = scmp.ne.s32.totalorder %s337, %s351
      %p353 = scmp.eq.s32.totalorder %s44, 0
      %p354 = por %p352, %p353
      %s356 = sadd.s32 %s355, 1
      %p359 = scmp.eq.s32.totalorder %s38, 1
      %p360 = scmp.ne.s32.totalorder %s355, %s357
      %p361 = scmp.eq.s32.totalorder %s38, 0
      %p362 = por %p360, %p361
      %p363 = scmp.ne.s32.totalorder %s355, %s357
      %p364 = scmp.eq.s32.totalorder %s43, 1
      %p365 = por %p363, %p364
      %p366 = scmp.ne.s32.totalorder %s357, %s358
      %p367 = scmp.eq.s32.totalorder %s43, 0
      %p368 = por %p366, %p367
      %p369 = scmp.ne.s32.totalorder %s357, %s358
      %p370 = scmp.eq.s32.totalorder %s44, 1
      %p371 = por %p369, %p370
      %p373 = scmp.ne.s32.totalorder %s358, %s372
      %p374 = scmp.eq.s32.totalorder %s44, 0
      %p375 = por %p373, %p374
      %s377 = sadd.s32 %s376, 1
      %p380 = scmp.eq.s32.totalorder %s38, 1
      %p381 = scmp.ne.s32.totalorder %s376, %s378
      %p382 = scmp.eq.s32.totalorder %s38, 0
      %p383 = por %p381, %p382
      %p384 = scmp.ne.s32.totalorder %s376, %s378
      %p385 = scmp.eq.s32.totalorder %s43, 1
      %p386 = por %p384, %p385
      %p387 = scmp.ne.s32.totalorder %s378, %s379
      %p388 = scmp.eq.s32.totalorder %s43, 0
      %p389 = por %p387, %p388
      %p390 = scmp.ne.s32.totalorder %s378, %s379
      %p391 = scmp.eq.s32.totalorder %s44, 1
      %p392 = por %p390, %p391
      %p394 = scmp.ne.s32.totalorder %s379, %s393
      %p395 = scmp.eq.s32.totalorder %s44, 0
      %p396 = por %p394, %p395
      %s398 = sadd.s32 %s397, 1
      %p401 = scmp.eq.s32.totalorder %s38, 1
      %p402 = scmp.ne.s32.totalorder %s397, %s399
      %p403 = scmp.eq.s32.totalorder %s38, 0
      %p404 = por %p402, %p403
      %p405 = scmp.ne.s32.totalorder %s397, %s399
      %p406 = scmp.eq.s32.totalorder %s43, 1
      %p407 = por %p405, %p406
      %p408 = scmp.ne.s32.totalorder %s399, %s400
      %p409 = scmp.eq.s32.totalorder %s43, 0
      %p410 = por %p408, %p409
      %p411 = scmp.ne.s32.totalorder %s399, %s400
      %p412 = scmp.eq.s32.totalorder %s44, 1
      %p413 = por %p411, %p412
      %p415 = scmp.ne.s32.totalorder %s400, %s414
      %p416 = scmp.eq.s32.totalorder %s44, 0
      %p417 = por %p415, %p416
      %s419 = sadd.s32 %s418, 1
      %p422 = scmp.eq.s32.totalorder %s38, 1
      %p423 = scmp.ne.s32.totalorder %s418, %s420
      %p424 = scmp.eq.s32.totalorder %s38, 0
      %p425 = por %p423, %p424
      %p426 = scmp.ne.s32.totalorder %s418, %s420
      %p427 = scmp.eq.s32.totalorder %s43, 1
      %p428 = por %p426, %p427
      %p429 = scmp.ne.s32.totalorder %s420, %s421
      %p430 = scmp.eq.s32.totalorder %s43, 0
      %p431 = por %p429, %p430
      %p432 = scmp.ne.s32.totalorder %s420, %s421
      %p433 = scmp.eq.s32.totalorder %s44, 1
      %p434 = por %p432, %p433
      %p436 = scmp.ne.s32.totalorder %s421, %s435
      %p437 = scmp.eq.s32.totalorder %s44, 0
      %p438 = por %p436, %p437
      %s440 = sadd.s32 %s439, 1
      %p443 = scmp.eq.s32.totalorder %s38, 1
      %p444 = scmp.ne.s32.totalorder %s439, %s441
      %p445 = scmp.eq.s32.totalorder %s38, 0
      %p446 = por %p444, %p445
      %p447 = scmp.ne.s32.totalorder %s439, %s441
      %p448 = scmp.eq.s32.totalorder %s43, 1
      %p449 = por %p447, %p448
      %p450 = scmp.ne.s32.totalorder %s441, %s442
      %p451 = scmp.eq.s32.totalorder %s43, 0
      %p452 = por %p450, %p451
      %p453 = scmp.ne.s32.totalorder %s441, %s442
      %p454 = scmp.eq.s32.totalorder %s44, 1
      %p455 = por %p453, %p454
      %p457 = scmp.ne.s32.totalorder %s442, %s456
      %p458 = scmp.eq.s32.totalorder %s44, 0
      %p459 = por %p457, %p458
      %s461 = sadd.s32 %s460, 1
      %p464 = scmp.eq.s32.totalorder %s38, 1
      %p465 = scmp.ne.s32.totalorder %s460, %s462
      %p466 = scmp.eq.s32.totalorder %s38, 0
      %p467 = por %p465, %p466
      %p468 = scmp.ne.s32.totalorder %s460, %s462
      %p469 = scmp.eq.s32.totalorder %s43, 1
      %p470 = por %p468, %p469
      %p471 = scmp.ne.s32.totalorder %s462, %s463
      %p472 = scmp.eq.s32.totalorder %s43, 0
      %p473 = por %p471, %p472
      %p474 = scmp.ne.s32.totalorder %s462, %s463
      %p475 = scmp.eq.s32.totalorder %s44, 1
      %p476 = por %p474, %p475
      %p478 = scmp.ne.s32.totalorder %s463, %s477
      %p479 = scmp.eq.s32.totalorder %s44, 0
      %p480 = por %p478, %p479
      %s482 = sadd.s32 %s481, 1
      %p485 = scmp.eq.s32.totalorder %s38, 1
      %p486 = scmp.ne.s32.totalorder %s481, %s483
      %p487 = scmp.eq.s32.totalorder %s38, 0
      %p488 = por %p486, %p487
      %p489 = scmp.ne.s32.totalorder %s481, %s483
      %p490 = scmp.eq.s32.totalorder %s43, 1
      %p491 = por %p489, %p490
      %p492 = scmp.ne.s32.totalorder %s483, %s484
      %p493 = scmp.eq.s32.totalorder %s43, 0
      %p494 = por %p492, %p493
      %p495 = scmp.ne.s32.totalorder %s483, %s484
      %p496 = scmp.eq.s32.totalorder %s44, 1
      %p497 = por %p495, %p496
      %p499 = scmp.ne.s32.totalorder %s484, %s498
      %p500 = scmp.eq.s32.totalorder %s44, 0
      %p501 = por %p499, %p500
      %s502 = ssub.s32 %s45, %s57
      %s503 = ssub.s32 %s46, %s53
      %s504 = sor.u32 %s502, %s503
      %p505 = scmp.eq.s32.totalorder %s504, 0
      %s507 = sadd.s32 %s506, 1
      %s508 = scalar_select %p505, %s506, %s507
      %p511 = pneg %p505
      %p512 = scmp.eq.s32.totalorder %s38, 1
      %p513 = por %p511, %p512
      %p514 = scmp.ne.s32.totalorder %s506, %s509
      %p515 = scmp.eq.s32.totalorder %s38, 0
      %p516 = por %p514, %p515
      %p517 = scmp.ne.s32.totalorder %s506, %s509
      %p518 = scmp.eq.s32.totalorder %s43, 1
      %p519 = por %p517, %p518
      %p520 = scmp.ne.s32.totalorder %s509, %s510
      %p521 = scmp.eq.s32.totalorder %s43, 0
      %p522 = por %p520, %p521
      %p523 = scmp.ne.s32.totalorder %s509, %s510
      %p524 = scmp.eq.s32.totalorder %s44, 1
      %p525 = por %p523, %p524
      %p527 = scmp.ne.s32.totalorder %s510, %s526
      %p528 = scmp.eq.s32.totalorder %s44, 0
      %p529 = por %p527, %p528
      %p530 = scmp.le.s32.totalorder 1, %s38
      %p531 = scmp.lt.s32.totalorder %s38, 3
      %p532 = pnand %p530, %p531
      %p533 = pneg %p532
      // Predicated region
      $region9: #{tpu_custom_call.1} parent=5 // pred_check
        _
      $region10: #{tpu_custom_call.1} parent=5 // pred_check_branch
        %535 = sbr.rel (%p532) target = $region12
      $region11: #{tpu_custom_call.1} parent=5 // pred_region
        %s536 = ssub.s32 %s38, 1
        // Predicated region
        $region13: #{tpu_custom_call.1} parent=11 // pred_check
          %p537 = pneg %p179
        $region14: #{tpu_custom_call.1} parent=11 // pred_check_branch
          %539 = sbr.rel (%p537) target = $region16
        $region15: #{tpu_custom_call.1} parent=11 // pred_region
          _
        $region16: #{tpu_custom_call.1} parent=11 // pred_fallthru
          _
        // Predicated region
        $region17: #{tpu_custom_call.1} parent=11 // pred_check
          %p540 = pneg %p200
        $region18: #{tpu_custom_call.1} parent=11 // pred_check_branch
          %542 = sbr.rel (%p540) target = $region20
        $region19: #{tpu_custom_call.1} parent=11 // pred_region
          %s544 = ssub.s32 16, 16
          %545 = vsyncadd [#allocation13], %s544
          %s547 = sshll.u32 [#allocation12], 4
          %s548 = int_to_ptr.vmem [resolvable:$true] %s547
          %550 = dma.hbm_to_vmem [thread:$0]  %s5, 16, %s548, [#allocation13]
        $region20: #{tpu_custom_call.1} parent=11 // pred_fallthru
          _
        // Predicated region
        $region21: #{tpu_custom_call.1} parent=11 // pred_check
          %p551 = pneg %p221
        $region22: #{tpu_custom_call.1} parent=11 // pred_check_branch
          %553 = sbr.rel (%p551) target = $region24
        $region23: #{tpu_custom_call.1} parent=11 // pred_region
          _
        $region24: #{tpu_custom_call.1} parent=11 // pred_fallthru
          _
        // Predicated region
        $region25: #{tpu_custom_call.1} parent=11 // pred_check
          %p554 = pneg %p242
        $region26: #{tpu_custom_call.1} parent=11 // pred_check_branch
          %556 = sbr.rel (%p554) target = $region28
        $region27: #{tpu_custom_call.1} parent=11 // pred_region
          %s558 = ssub.s32 16, 16
          %559 = vsyncadd [#allocation13], %s558
          %s561 = sshll.u32 [#allocation14], 4
          %s562 = int_to_ptr.vmem [resolvable:$true] %s561
          %564 = dma.hbm_to_vmem [thread:$0]  %s7, 16, %s562, [#allocation13]
        $region28: #{tpu_custom_call.1} parent=11 // pred_fallthru
          _
        // Predicated region
        $region29: #{tpu_custom_call.1} parent=11 // pred_check
          %p565 = pneg %p263
        $region30: #{tpu_custom_call.1} parent=11 // pred_check_branch
          %567 = sbr.rel (%p565) target = $region32
        $region31: #{tpu_custom_call.1} parent=11 // pred_region
          %s569 = ssub.s32 256, 256
          %570 = vsyncadd [#allocation16], %s569
          %s571 = sshll.u32 [#allocation15], 4
          %s572 = int_to_ptr.vmem [resolvable:$true] %s571
          %577 = dma.hbm_to_vmem [thread:$0]  %s8, 256, %s572, [#allocation16], 64, 64, 4
        $region32: #{tpu_custom_call.1} parent=11 // pred_fallthru
          _
        // Predicated region
        $region33: #{tpu_custom_call.1} parent=11 // pred_check
          %p578 = pneg %p284
        $region34: #{tpu_custom_call.1} parent=11 // pred_check_branch
          %580 = sbr.rel (%p578) target = $region36
        $region35: #{tpu_custom_call.1} parent=11 // pred_region
          %s582 = ssub.s32 16, 16
          %583 = vsyncadd [#allocation16], %s582
          %s585 = sshll.u32 [#allocation17], 4
          %s586 = int_to_ptr.vmem [resolvable:$true] %s585
          %588 = dma.hbm_to_vmem [thread:$0]  %s9, 16, %s586, [#allocation16]
        $region36: #{tpu_custom_call.1} parent=11 // pred_fallthru
          _
        // Predicated region
        $region37: #{tpu_custom_call.1} parent=11 // pred_check
          %p589 = pneg %p305
        $region38: #{tpu_custom_call.1} parent=11 // pred_check_branch
          %591 = sbr.rel (%p589) target = $region40
        $region39: #{tpu_custom_call.1} parent=11 // pred_region
          _
        $region40: #{tpu_custom_call.1} parent=11 // pred_fallthru
          _
        // Predicated region
        $region41: #{tpu_custom_call.1} parent=11 // pred_check
          %p592 = pneg %p326
        $region42: #{tpu_custom_call.1} parent=11 // pred_check_branch
          %594 = sbr.rel (%p592) target = $region44
        $region43: #{tpu_custom_call.1} parent=11 // pred_region
          _
        $region44: #{tpu_custom_call.1} parent=11 // pred_fallthru
          _
        // Predicated region
        $region45: #{tpu_custom_call.1} parent=11 // pred_check
          %p595 = pneg %p347
        $region46: #{tpu_custom_call.1} parent=11 // pred_check_branch
          %597 = sbr.rel (%p595) target = $region48
        $region47: #{tpu_custom_call.1} parent=11 // pred_region
          _
        $region48: #{tpu_custom_call.1} parent=11 // pred_fallthru
          _
        // Predicated region
        $region49: #{tpu_custom_call.1} parent=11 // pred_check
          %p598 = pneg %p368
        $region50: #{tpu_custom_call.1} parent=11 // pred_check_branch
          %600 = sbr.rel (%p598) target = $region52
        $region51: #{tpu_custom_call.1} parent=11 // pred_region
          _
        $region52: #{tpu_custom_call.1} parent=11 // pred_fallthru
          _
        // Predicated region
        $region53: #{tpu_custom_call.1} parent=11 // pred_check
          %p601 = pneg %p389
        $region54: #{tpu_custom_call.1} parent=11 // pred_check_branch
          %603 = sbr.rel (%p601) target = $region56
        $region55: #{tpu_custom_call.1} parent=11 // pred_region
          %s605 = ssub.s32 256, 256
          %606 = vsyncadd [#allocation19], %s605
          %s607 = sshll.u32 [#allocation18], 4
          %s608 = int_to_ptr.vmem [resolvable:$true] %s607
          %613 = dma.hbm_to_vmem [thread:$0]  %s14, 256, %s608, [#allocation19], 64, 64, 4
        $region56: #{tpu_custom_call.1} parent=11 // pred_fallthru
          _
        // Predicated region
        $region57: #{tpu_custom_call.1} parent=11 // pred_check
          %p614 = pneg %p410
        $region58: #{tpu_custom_call.1} parent=11 // pred_check_branch
          %616 = sbr.rel (%p614) target = $region60
        $region59: #{tpu_custom_call.1} parent=11 // pred_region
          _
        $region60: #{tpu_custom_call.1} parent=11 // pred_fallthru
          _
        // Predicated region
        $region61: #{tpu_custom_call.1} parent=11 // pred_check
          %p617 = pneg %p431
        $region62: #{tpu_custom_call.1} parent=11 // pred_check_branch
          %619 = sbr.rel (%p617) target = $region64
        $region63: #{tpu_custom_call.1} parent=11 // pred_region
          _
        $region64: #{tpu_custom_call.1} parent=11 // pred_fallthru
          _
        // Predicated region
        $region65: #{tpu_custom_call.1} parent=11 // pred_check
          %p620 = pneg %p452
        $region66: #{tpu_custom_call.1} parent=11 // pred_check_branch
          %622 = sbr.rel (%p620) target = $region68
        $region67: #{tpu_custom_call.1} parent=11 // pred_region
          _
        $region68: #{tpu_custom_call.1} parent=11 // pred_fallthru
          _
        // Predicated region
        $region69: #{tpu_custom_call.1} parent=11 // pred_check
          %p623 = pneg %p473
        $region70: #{tpu_custom_call.1} parent=11 // pred_check_branch
          %625 = sbr.rel (%p623) target = $region72
        $region71: #{tpu_custom_call.1} parent=11 // pred_region
          _
        $region72: #{tpu_custom_call.1} parent=11 // pred_fallthru
          _
        // Predicated region
        $region73: #{tpu_custom_call.1} parent=11 // pred_check
          %p626 = pneg %p494
        $region74: #{tpu_custom_call.1} parent=11 // pred_check_branch
          %628 = sbr.rel (%p626) target = $region76
        $region75: #{tpu_custom_call.1} parent=11 // pred_region
          _
        $region76: #{tpu_custom_call.1} parent=11 // pred_fallthru
          _
      $region12: #{tpu_custom_call.1} parent=5 // pred_fallthru
        _
      %p629 = scmp.lt.s32.totalorder %s38, 2
      // Predicated region
      $region77: #{tpu_custom_call.1} parent=5 // pred_check
        %p630 = pneg %p629
      $region78: #{tpu_custom_call.1} parent=5 // pred_check_branch
        %632 = sbr.rel (%p630) target = $region80
      $region79: #{tpu_custom_call.1} parent=5 // pred_region
        // Predicated region
        $region81: #{tpu_custom_call.1} parent=79 // pred_check
          %p633 = pneg %p72
        $region82: #{tpu_custom_call.1} parent=79 // pred_check_branch
          %635 = sbr.rel (%p633) target = $region84
        $region83: #{tpu_custom_call.1} parent=79 // pred_region
          %p636 = scmp.lt.s32.totalorder %s45, 1
          %s637 = scalar_select %p636, %s45, 1
          %p638 = scmp.lt.s32.totalorder %s46, 0
          %s639 = scalar_select %p638, %s46, 0
          %s640 = sadd.s32 %s639, %s637
          %s641 = smul.addr %s640, 8
          %s642 = scalar_lea.vmem %s0, %s641
        $region84: #{tpu_custom_call.1} parent=79 // pred_fallthru
          _
        // Predicated region
        $region85: #{tpu_custom_call.1} parent=79 // pred_check
          %p643 = pneg %p98
        $region86: #{tpu_custom_call.1} parent=79 // pred_check_branch
          %645 = sbr.rel (%p643) target = $region88
        $region87: #{tpu_custom_call.1} parent=79 // pred_region
          %s646 = sand.u32 %s88, 1
          %s647 = scalar_lea.sflag [#allocation7], %s646
          %s648 = sand.u32 %s88, 1
          %s649 = smul.addr %s648, 4
          %s650 = scalar_lea.vmem [#allocation6], %s649
          %s652 = ssub.s32 64, 64
          %653 = vsyncadd %s647, %s652
          %s654 = smul.addr %s45, 64
          %s655 = scalar_lea.hbm %s1, %s654
          %s657 = sshll.u32 %s650, 4
          %s658 = int_to_ptr.vmem [resolvable:$true] %s657
          %660 = dma.hbm_to_vmem [thread:$0]  %s655, 64, %s658, %s647
        $region88: #{tpu_custom_call.1} parent=79 // pred_fallthru
          _
        // Predicated region
        $region89: #{tpu_custom_call.1} parent=79 // pred_check
          %p661 = pneg %p124
        $region90: #{tpu_custom_call.1} parent=79 // pred_check_branch
          %663 = sbr.rel (%p661) target = $region92
        $region91: #{tpu_custom_call.1} parent=79 // pred_region
          %s664 = sand.u32 %s38, 1
          %s665 = scalar_lea.sflag [#allocation10], %s664
          %s666 = sand.u32 %s114, 1
          %s667 = smul.addr %s666, 4
          %s668 = scalar_lea.vmem [#allocation9], %s667
          %s670 = ssub.s32 64, 64
          %671 = vsyncadd %s665, %s670
          %s672 = smul.addr %s45, 64
          %s673 = scalar_lea.hbm %s2, %s672
          %s675 = sshll.u32 %s668, 4
          %s676 = int_to_ptr.vmem [resolvable:$true] %s675
          %678 = dma.hbm_to_vmem [thread:$0]  %s673, 64, %s676, %s665
        $region92: #{tpu_custom_call.1} parent=79 // pred_fallthru
          _
        // Predicated region
        $region93: #{tpu_custom_call.1} parent=79 // pred_check
          %p679 = pneg %p152
        $region94: #{tpu_custom_call.1} parent=79 // pred_check_branch
          %681 = sbr.rel (%p679) target = $region96
        $region95: #{tpu_custom_call.1} parent=79 // pred_region
          %s682 = sand.u32 %s38, 1
          %s683 = scalar_lea.sflag [#allocation10], %s682
          %s684 = sand.u32 %s142, 1
          %s685 = smul.addr %s684, 4
          %s686 = scalar_lea.vmem [#allocation11], %s685
          %s688 = ssub.s32 64, 64
          %689 = vsyncadd %s683, %s688
          %s690 = sadd.s32 %s46, %s45
          %s691 = smul.addr %s690, 64
          %s692 = scalar_lea.hbm %s3, %s691
          %s694 = sshll.u32 %s686, 4
          %s695 = int_to_ptr.vmem [resolvable:$true] %s694
          %697 = dma.hbm_to_vmem [thread:$0]  %s692, 64, %s695, %s683
        $region96: #{tpu_custom_call.1} parent=79 // pred_fallthru
          _
      $region80: #{tpu_custom_call.1} parent=5 // pred_fallthru
        _
      %p698 = scmp.le.s32.totalorder 1, %s38
      %p699 = scmp.lt.s32.totalorder %s38, 3
      %p700 = pnand %p698, %p699
      %p701 = pneg %p700
      // Predicated region
      $region97: #{tpu_custom_call.1} parent=5 // pred_check
        _
      $region98: #{tpu_custom_call.1} parent=5 // pred_check_branch
        %703 = sbr.rel (%p700) target = $region100
      $region99: #{tpu_custom_call.1} parent=5 // pred_region
        %s704 = ssub.s32 %s38, 1
        %s705 = sand.u32 %s91, 1
        %s706 = scalar_lea.sflag [#allocation7], %s705
        %s707 = sand.u32 %s91, 1
        %s708 = smul.addr %s707, 4
        %s709 = scalar_lea.vmem [#allocation6], %s708
        // Predicated region
        $region101: #{tpu_custom_call.1} parent=99 // pred_check
          %p710 = pneg %p104
        $region102: #{tpu_custom_call.1} parent=99 // pred_check_branch
          %712 = sbr.rel (%p710) target = $region104
        $region103: #{tpu_custom_call.1} parent=99 // pred_region
          %713 = dma.done %s706, 64
        $region104: #{tpu_custom_call.1} parent=99 // pred_fallthru
          _
        %s714 = sand.u32 %s43, 1
        %s715 = scalar_lea.sflag [#allocation10], %s714
        %s716 = sand.u32 %s117, 1
        %s717 = smul.addr %s716, 4
        %s718 = scalar_lea.vmem [#allocation9], %s717
        // Predicated region
        $region105: #{tpu_custom_call.1} parent=99 // pred_check
          %p719 = pneg %p130
        $region106: #{tpu_custom_call.1} parent=99 // pred_check_branch
          %721 = sbr.rel (%p719) target = $region108
        $region107: #{tpu_custom_call.1} parent=99 // pred_region
          %722 = dma.done %s715, 64
        $region108: #{tpu_custom_call.1} parent=99 // pred_fallthru
          _
        %s723 = sand.u32 %s43, 1
        %s724 = scalar_lea.sflag [#allocation10], %s723
        %s725 = sand.u32 %s145, 1
        %s726 = smul.addr %s725, 4
        %s727 = scalar_lea.vmem [#allocation11], %s726
        // Predicated region
        $region109: #{tpu_custom_call.1} parent=99 // pred_check
          %p728 = pneg %p158
        $region110: #{tpu_custom_call.1} parent=99 // pred_check_branch
          %730 = sbr.rel (%p728) target = $region112
        $region111: #{tpu_custom_call.1} parent=99 // pred_region
          %731 = dma.done %s724, 64
        $region112: #{tpu_custom_call.1} parent=99 // pred_fallthru
          _
        // Predicated region
        $region113: #{tpu_custom_call.1} parent=99 // pred_check
          %p732 = pneg %p200
        $region114: #{tpu_custom_call.1} parent=99 // pred_check_branch
          %734 = sbr.rel (%p732) target = $region116
        $region115: #{tpu_custom_call.1} parent=99 // pred_region
          %735 = dma.done [#allocation13], 16
        $region116: #{tpu_custom_call.1} parent=99 // pred_fallthru
          _
        // Predicated region
        $region117: #{tpu_custom_call.1} parent=99 // pred_check
          %p736 = pneg %p242
        $region118: #{tpu_custom_call.1} parent=99 // pred_check_branch
          %738 = sbr.rel (%p736) target = $region120
        $region119: #{tpu_custom_call.1} parent=99 // pred_region
          %739 = dma.done [#allocation13], 16
        $region120: #{tpu_custom_call.1} parent=99 // pred_fallthru
          _
        // Predicated region
        $region121: #{tpu_custom_call.1} parent=99 // pred_check
          %p740 = pneg %p263
        $region122: #{tpu_custom_call.1} parent=99 // pred_check_branch
          %742 = sbr.rel (%p740) target = $region124
        $region123: #{tpu_custom_call.1} parent=99 // pred_region
          %743 = dma.done [#allocation16], 256
        $region124: #{tpu_custom_call.1} parent=99 // pred_fallthru
          _
        // Predicated region
        $region125: #{tpu_custom_call.1} parent=99 // pred_check
          %p744 = pneg %p284
        $region126: #{tpu_custom_call.1} parent=99 // pred_check_branch
          %746 = sbr.rel (%p744) target = $region128
        $region127: #{tpu_custom_call.1} parent=99 // pred_region
          %747 = dma.done [#allocation16], 16
        $region128: #{tpu_custom_call.1} parent=99 // pred_fallthru
          _
        // Predicated region
        $region129: #{tpu_custom_call.1} parent=99 // pred_check
          %p748 = pneg %p389
        $region130: #{tpu_custom_call.1} parent=99 // pred_check_branch
          %750 = sbr.rel (%p748) target = $region132
        $region131: #{tpu_custom_call.1} parent=99 // pred_region
          %751 = dma.done [#allocation19], 256
        $region132: #{tpu_custom_call.1} parent=99 // pred_fallthru
          _
        %p752 = scmp.lt.s32.totalorder %s47, 1
        %s753 = scalar_select %p752, %s47, 1
        %p754 = scmp.lt.s32.totalorder %s48, 0
        %s755 = scalar_select %p754, %s48, 0
        %s756 = sadd.s32 %s755, %s753
        %s757 = smul.addr %s756, 8
        %s758 = scalar_lea.vmem %s0, %s757
        %p759 = pneg %p78
        %p760 = pneg %p75
        %s761 = sand.u32 %s91, 1
        %s762 = scalar_lea.sflag [#allocation7], %s761
        %s763 = sand.u32 %s91, 1
        %s764 = smul.addr %s763, 4
        %s765 = scalar_lea.vmem [#allocation6], %s764
        %p766 = pneg %p104
        %p767 = pneg %p101
        %s768 = sand.u32 %s43, 1
        %s769 = scalar_lea.sflag [#allocation10], %s768
        %s770 = sand.u32 %s117, 1
        %s771 = smul.addr %s770, 4
        %s772 = scalar_lea.vmem [#allocation9], %s771
        %p773 = pneg %p130
        %p774 = pneg %p127
        %s775 = sand.u32 %s43, 1
        %s776 = scalar_lea.sflag [#allocation10], %s775
        %s777 = sand.u32 %s145, 1
        %s778 = smul.addr %s777, 4
        %s779 = scalar_lea.vmem [#allocation11], %s778
        %p780 = pneg %p158
        %p781 = pneg %p155
        %p782 = pneg %p179
        %p783 = pneg %p176
        %p784 = pneg %p200
        %p785 = pneg %p197
        %p786 = pneg %p221
        %p787 = pneg %p218
        %p788 = pneg %p242
        %p789 = pneg %p239
        %p790 = pneg %p263
        %p791 = pneg %p260
        %p792 = pneg %p284
        %p793 = pneg %p281
        %p794 = pneg %p305
        %p795 = pneg %p302
        %p796 = pneg %p326
        %p797 = pneg %p323
        %p798 = pneg %p347
        %p799 = pneg %p344
        %p800 = pneg %p368
        %p801 = pneg %p365
        %p802 = pneg %p389
        %p803 = pneg %p386
        %p804 = pneg %p410
        %p805 = pneg %p407
        %p806 = pneg %p431
        %p807 = pneg %p428
        %p808 = pneg %p452
        %p809 = pneg %p449
        %p810 = pneg %p473
        %p811 = pneg %p470
        %p812 = pneg %p494
        %p813 = pneg %p491
        %p814 = pneg %p522
        %p815 = pneg %p519
        %s816 = sand.u32 %s509, 1
        %s817 = scalar_lea.sflag [#allocation8], %s816
        %s818 = sand.u32 %s509, 1
        %s819 = smul.addr %s818, 8
        %s820 = scalar_lea.vmem [#allocation20], %s819
        %p821 = scmp.lt.s32.totalorder %s47, 1
        %s822 = scalar_select %p821, %s47, 1
        %p823 = scmp.lt.s32.totalorder %s48, 0
        %s824 = scalar_select %p823, %s48, 0
        %s825 = sadd.s32 %s824, %s822
        %s826 = smul.addr %s825, 8
        %s827 = scalar_lea.vmem %s0, %s826
        %p829 = scmp.eq.s32.totalorder %s48, 0
        // Predicated region
        $region133: #{tpu_custom_call.1} parent=99 // pred_check
          %p830 = pneg %p829
        $region134: #{tpu_custom_call.1} parent=99 // pred_check_branch
          %832 = sbr.rel (%p830) target = $region136
        $region135: #{tpu_custom_call.1} parent=99 // pred_region
          %v833 = vld [vmem:[%s709] sm:$0xf]
          %v834 = vld [vmem:[%s6] sm:$0xf]
          %v835 = vld [vmem:[%s6 + $0x4] sm:$0xf]
          %v836 = vld [vmem:[%s6 + $0x8] sm:$0xf]
          %v837 = vld [vmem:[%s6 + $0xc] sm:$0xf]
          %v838 = vld [vmem:[#allocation14] sm:$0x1]
          %v840 = vlaneseq
          %v841 = vshrl.u32 %v840, 7
          %v842 = vsub.s32 0, %v841
          %v843 = vrot.slane %v838, %v842
          %v849 = vunpack.c.l.b16 %v834
          %v850 = vunpack.c.l.b16 %v835
          %v851 = vunpack.c.l.b16 %v836
          %v852 = vunpack.c.l.b16 %v837
          %v853 = vpack.c.b16 %v850, %v849
          %v854 = vpack.c.b16 %v852, %v851
          %vm857 = vcmask 261120
          %v859 = vsel %vm857, %v833, 0
          %861 = vmatprep.subr.bf16.mxu0 0
          %862 = vmatpush1.bf16.msra.mxu0 0
          %863 = vmatprep.subr.bf16.mxu0 0
          %864 = vmatpush1.bf16.msra.mxu0 0
          %865 = vmatprep.subr.bf16.mxu0 0
          %866 = vmatpush1.bf16.msra.mxu0 0
          %867 = vmatprep.subr.bf16.mxu0 0
          %868 = vmatpush1.bf16.msra.mxu0 0
          %869 = vmatprep.subr.bf16.mxu0 0
          %870 = vmatpush1.bf16.msra.mxu0 0
          %871 = vmatprep.subr.bf16.mxu0 0
          %872 = vmatpush1.bf16.msra.mxu0 0
          %873 = vmatprep.subr.bf16.mxu0 0
          %874 = vmatpush1.bf16.msra.mxu0 %v854
          %875 = vmatprep.subr.bf16.mxu0 0
          %876 = vmatpush1.bf16.msra.mxu0 %v853
          %877 = vmatprep.subr.bf16.mxu0 0
          %878 = vmatpush2.bf16.msra.mxu0 0
          %879 = vmatprep.subr.bf16.mxu0 0
          %880 = vmatpush2.bf16.msra.mxu0 0
          %881 = vmatprep.subr.bf16.mxu0 0
          %882 = vmatpush2.bf16.msra.mxu0 0
          %883 = vmatprep.subr.bf16.mxu0 0
          %884 = vmatpush2.bf16.msra.mxu0 0
          %885 = vmatprep.subr.bf16.mxu0 0
          %886 = vmatpush2.bf16.msra.mxu0 0
          %887 = vmatprep.subr.bf16.mxu0 0
          %888 = vmatpush2.bf16.msra.mxu0 0
          %889 = vmatprep.subr.bf16.mxu0 0
          %890 = vmatpush2.bf16.msra.mxu0 0
          %891 = vmatprep.subr.bf16.mxu0 0
          %892 = vmatpush2.bf16.msra.mxu0 0
          %893 = vmatprep.mubr.bf16.mxu0 0
          %894 = vmatmul.mubr.bf16.gmra.mxu0 %v859
          %v895 = vpop.f32.mrf.mxu0
          %v896 = vadd.f32 %v843, %v895
          %v897 = vpop.f32.mrf.mxu0
          %v898 = vpop.f32.mrf.mxu0
          %v899 = vpop.f32.mrf.mxu0
          %900 = vdwg.mxu0
          %v901 = vpack.c.bf16 %v896, %v896
          %vm902 = vcmask 257024
          %903 = vst.msk [vmem:[#allocation3] sm:$0xf] %vm902, %v901
          %v904 = vld [vmem:[%s718] sm:$0xf]
          %v905 = vld [vmem:[#allocation15] sm:$0xf]
          %v906 = vld [vmem:[#allocation15 + $0x4] sm:$0xf]
          %v907 = vld [vmem:[#allocation15 + $0x8] sm:$0xf]
          %v908 = vld [vmem:[#allocation15 + $0xc] sm:$0xf]
          %v909 = vld [vmem:[#allocation17] sm:$0x1]
          %v911 = vlaneseq
          %v912 = vshrl.u32 %v911, 7
          %v913 = vsub.s32 0, %v912
          %v914 = vrot.slane %v909, %v913
          %v920 = vunpack.c.l.b16 %v905
          %v921 = vunpack.c.l.b16 %v906
          %v922 = vunpack.c.l.b16 %v907
          %v923 = vunpack.c.l.b16 %v908
          %v924 = vpack.c.b16 %v921, %v920
          %v925 = vpack.c.b16 %v923, %v922
          %v929 = vsel %vm857, %v904, 0
          %931 = vmatprep.subr.bf16.mxu0 0
          %932 = vmatpush1.bf16.msra.mxu0 0
          %933 = vmatprep.subr.bf16.mxu0 0
          %934 = vmatpush1.bf16.msra.mxu0 0
          %935 = vmatprep.subr.bf16.mxu0 0
          %936 = vmatpush1.bf16.msra.mxu0 0
          %937 = vmatprep.subr.bf16.mxu0 0
          %938 = vmatpush1.bf16.msra.mxu0 0
          %939 = vmatprep.subr.bf16.mxu0 0
          %940 = vmatpush1.bf16.msra.mxu0 0
          %941 = vmatprep.subr.bf16.mxu0 0
          %942 = vmatpush1.bf16.msra.mxu0 0
          %943 = vmatprep.subr.bf16.mxu0 0
          %944 = vmatpush1.bf16.msra.mxu0 %v925
          %945 = vmatprep.subr.bf16.mxu0 0
          %946 = vmatpush1.bf16.msra.mxu0 %v924
          %947 = vmatprep.subr.bf16.mxu0 0
          %948 = vmatpush2.bf16.msra.mxu0 0
          %949 = vmatprep.subr.bf16.mxu0 0
          %950 = vmatpush2.bf16.msra.mxu0 0
          %951 = vmatprep.subr.bf16.mxu0 0
          %952 = vmatpush2.bf16.msra.mxu0 0
          %953 = vmatprep.subr.bf16.mxu0 0
          %954 = vmatpush2.bf16.msra.mxu0 0
          %955 = vmatprep.subr.bf16.mxu0 0
          %956 = vmatpush2.bf16.msra.mxu0 0
          %957 = vmatprep.subr.bf16.mxu0 0
          %958 = vmatpush2.bf16.msra.mxu0 0
          %959 = vmatprep.subr.bf16.mxu0 0
          %960 = vmatpush2.bf16.msra.mxu0 0
          %961 = vmatprep.subr.bf16.mxu0 0
          %962 = vmatpush2.bf16.msra.mxu0 0
          %963 = vmatprep.mubr.bf16.mxu0 0
          %964 = vmatmul.mubr.bf16.gmra.mxu0 %v929
          %v965 = vpop.f32.mrf.mxu0
          %v966 = vadd.f32 %v914, %v965
          %v967 = vpop.f32.mrf.mxu0
          %v968 = vpop.f32.mrf.mxu0
          %v969 = vpop.f32.mrf.mxu0
          %970 = vdwg.mxu0
          %v971 = vpack.c.bf16 %v966, %v966
          %972 = vst.msk [vmem:[#allocation4] sm:$0xf] %vm902, %v971
        $region136: #{tpu_custom_call.1} parent=99 // pred_fallthru
          _
        %v973 = vld [vmem:[%s827] sm:$0xff]
        %v974 = vpack.c.bf16 %v973, %v973
        %v975 = vld [vmem:[%s4] sm:$0xf]
        %v976 = vld [vmem:[%s4 + $0x4] sm:$0xf]
        %v977 = vld [vmem:[%s4 + $0x8] sm:$0xf]
        %v978 = vld [vmem:[%s4 + $0xc] sm:$0xf]
        %v979 = vld [vmem:[#allocation12] sm:$0x1]
        %v981 = vlaneseq
        %v982 = vshrl.u32 %v981, 7
        %v983 = vsub.s32 0, %v982
        %v984 = vrot.slane %v979, %v983
        %v990 = vunpack.c.l.b16 %v975
        %v991 = vunpack.c.l.b16 %v976
        %v992 = vunpack.c.l.b16 %v977
        %v993 = vunpack.c.l.b16 %v978
        %v994 = vpack.c.b16 %v991, %v990
        %v995 = vpack.c.b16 %v993, %v992
        %vm998 = vcmask 261120
        %v1000 = vsel %vm998, %v974, 0
        %1002 = vmatprep.subr.bf16.mxu0 0
        %1003 = vmatpush1.bf16.msra.mxu0 0
        %1004 = vmatprep.subr.bf16.mxu0 0
        %1005 = vmatpush1.bf16.msra.mxu0 0
        %1006 = vmatprep.subr.bf16.mxu0 0
        %1007 = vmatpush1.bf16.msra.mxu0 0
        %1008 = vmatprep.subr.bf16.mxu0 0
        %1009 = vmatpush1.bf16.msra.mxu0 0
        %1010 = vmatprep.subr.bf16.mxu0 0
        %1011 = vmatpush1.bf16.msra.mxu0 0
        %1012 = vmatprep.subr.bf16.mxu0 0
        %1013 = vmatpush1.bf16.msra.mxu0 0
        %1014 = vmatprep.subr.bf16.mxu0 0
        %1015 = vmatpush1.bf16.msra.mxu0 %v995
        %1016 = vmatprep.subr.bf16.mxu0 0
        %1017 = vmatpush1.bf16.msra.mxu0 %v994
        %1018 = vmatprep.subr.bf16.mxu0 0
        %1019 = vmatpush2.bf16.msra.mxu0 0
        %1020 = vmatprep.subr.bf16.mxu0 0
        %1021 = vmatpush2.bf16.msra.mxu0 0
        %1022 = vmatprep.subr.bf16.mxu0 0
        %1023 = vmatpush2.bf16.msra.mxu0 0
        %1024 = vmatprep.subr.bf16.mxu0 0
        %1025 = vmatpush2.bf16.msra.mxu0 0
        %1026 = vmatprep.subr.bf16.mxu0 0
        %1027 = vmatpush2.bf16.msra.mxu0 0
        %1028 = vmatprep.subr.bf16.mxu0 0
        %1029 = vmatpush2.bf16.msra.mxu0 0
        %1030 = vmatprep.subr.bf16.mxu0 0
        %1031 = vmatpush2.bf16.msra.mxu0 0
        %1032 = vmatprep.subr.bf16.mxu0 0
        %1033 = vmatpush2.bf16.msra.mxu0 0
        %1034 = vmatprep.mubr.bf16.mxu0 0
        %1035 = vmatmul.mubr.bf16.gmra.mxu0 %v1000
        %v1036 = vpop.f32.mrf.mxu0
        %v1037 = vadd.f32 %v984, %v1036
        %v1038 = vpop.f32.mrf.mxu0
        %v1039 = vpop.f32.mrf.mxu0
        %v1040 = vpop.f32.mrf.mxu0
        %1041 = vdwg.mxu0
        %v1042 = vpack.c.bf16 %v1037, %v1037
        %vm1043 = vcmask 257024
        %1044 = vst.msk [vmem:[#allocation2] sm:$0xf] %vm1043, %v1042
        %v1045 = vld [vmem:[%s727] sm:$0xf]
        %v1046 = vunpack.c.l.bf16 %v1045
        %v1047 = vld [vmem:[#allocation2] sm:$0xf]
        %v1048 = vld [vmem:[#allocation3] sm:$0xf]
        %v1049 = vld [vmem:[#allocation4] sm:$0xf]
        %vm1050 = vcmask 64512
        %v1052 = vsel %vm1050, %v1047, 0
        %v1055 = vsel %vm1050, %v1048, 0
        %1057 = vmatprep.subr.bf16.mxu0 0
        %1058 = vmatpush1.bf16.xpose.msra.mxu0 0
        %1059 = vmatprep.subr.bf16.mxu0 0
        %1060 = vmatpush1.bf16.xpose.msra.mxu0 0
        %1061 = vmatprep.subr.bf16.mxu0 0
        %1062 = vmatpush1.bf16.xpose.msra.mxu0 0
        %1063 = vmatprep.subr.bf16.mxu0 0
        %1064 = vmatpush1.bf16.xpose.msra.mxu0 0
        %1065 = vmatprep.subr.bf16.mxu0 0
        %1066 = vmatpush1.bf16.xpose.msra.mxu0 0
        %1067 = vmatprep.subr.bf16.mxu0 0
        %1068 = vmatpush1.bf16.xpose.msra.mxu0 0
        %1069 = vmatprep.subr.bf16.mxu0 0
        %1070 = vmatpush1.bf16.xpose.msra.mxu0 0
        %1071 = vmatprep.subr.bf16.mxu0 0
        %1072 = vmatpush1.bf16.xpose.msra.mxu0 %v1055
        %1073 = vmatprep.subr.bf16.mxu0 0
        %1074 = vmatpush2.bf16.xpose.msra.mxu0 0
        %1075 = vmatprep.subr.bf16.mxu0 0
        %1076 = vmatpush2.bf16.xpose.msra.mxu0 0
        %1077 = vmatprep.subr.bf16.mxu0 0
        %1078 = vmatpush2.bf16.xpose.msra.mxu0 0
        %1079 = vmatprep.subr.bf16.mxu0 0
        %1080 = vmatpush2.bf16.xpose.msra.mxu0 0
        %1081 = vmatprep.subr.bf16.mxu0 0
        %1082 = vmatpush2.bf16.xpose.msra.mxu0 0
        %1083 = vmatprep.subr.bf16.mxu0 0
        %1084 = vmatpush2.bf16.xpose.msra.mxu0 0
        %1085 = vmatprep.subr.bf16.mxu0 0
        %1086 = vmatpush2.bf16.xpose.msra.mxu0 0
        %1087 = vmatprep.subr.bf16.mxu0 0
        %1088 = vmatpush2.bf16.xpose.msra.mxu0 0
        %1089 = vmatprep.mubr.bf16.mxu0 0
        %1090 = vmatmul.mubr.bf16.gmra.mxu0 %v1052
        %v1091 = vpop.f32.mrf.mxu0
        %v1092 = vadd.f32 %v1046, %v1091
        %v1093 = vpop.f32.mrf.mxu0
        %v1094 = vpop.f32.mrf.mxu0
        %v1095 = vpop.f32.mrf.mxu0
        %1096 = vdwg.mxu0
        %v1097 = vsel %vm1050, %v1092, -inf
        %1098 = vmax.xlane.f32.xlu0 %v1097
        %v1099 = vpop.xlane.xlu0 %1098
        %v1100 = vsub.f32 %v1092, %v1099
        %v1101 = vmul.f32 %v1100, 1.442695
        %v1102 = vpow.pop %v1101
        %v1103 = vsel %vm1050, %v1102, 0.0
        %1104 = vadd.xlane.f32.xlu0 %v1103
        %v1105 = vpop.xlane.xlu0 %1104
        %v1106 = vrcp.pop %v1105
        %v1107 = vmul.f32 %v1102, %v1106
        %v1108 = vpack.c.bf16 %v1107, %v1107
        %v1110 = vsel %vm1050, %v1108, 0
        %vm1112 = vcmask 1043456
        %v1114 = vsel %vm1112, %v1049, 0
        %1116 = vmatprep.subr.bf16.mxu0 0
        %1117 = vmatpush1.bf16.msra.mxu0 0
        %1118 = vmatprep.subr.bf16.mxu0 0
        %1119 = vmatpush1.bf16.msra.mxu0 0
        %1120 = vmatprep.subr.bf16.mxu0 0
        %1121 = vmatpush1.bf16.msra.mxu0 0
        %1122 = vmatprep.subr.bf16.mxu0 0
        %1123 = vmatpush1.bf16.msra.mxu0 0
        %1124 = vmatprep.subr.bf16.mxu0 0
        %1125 = vmatpush1.bf16.msra.mxu0 0
        %1126 = vmatprep.subr.bf16.mxu0 0
        %1127 = vmatpush1.bf16.msra.mxu0 0
        %1128 = vmatprep.subr.bf16.mxu0 0
        %1129 = vmatpush1.bf16.msra.mxu0 0
        %1130 = vmatprep.subr.bf16.mxu0 0
        %1131 = vmatpush1.bf16.msra.mxu0 %v1114
        %1132 = vmatprep.subr.bf16.mxu0 0
        %1133 = vmatpush2.bf16.msra.mxu0 0
        %1134 = vmatprep.subr.bf16.mxu0 0
        %1135 = vmatpush2.bf16.msra.mxu0 0
        %1136 = vmatprep.subr.bf16.mxu0 0
        %1137 = vmatpush2.bf16.msra.mxu0 0
        %1138 = vmatprep.subr.bf16.mxu0 0
        %1139 = vmatpush2.bf16.msra.mxu0 0
        %1140 = vmatprep.subr.bf16.mxu0 0
        %1141 = vmatpush2.bf16.msra.mxu0 0
        %1142 = vmatprep.subr.bf16.mxu0 0
        %1143 = vmatpush2.bf16.msra.mxu0 0
        %1144 = vmatprep.subr.bf16.mxu0 0
        %1145 = vmatpush2.bf16.msra.mxu0 0
        %1146 = vmatprep.subr.bf16.mxu0 0
        %1147 = vmatpush2.bf16.msra.mxu0 0
        %1148 = vmatprep.mubr.bf16.mxu0 0
        %1149 = vmatmul.mubr.bf16.gmra.mxu0 %v1110
        %v1150 = vpop.f32.mrf.mxu0
        %v1151 = vadd.f32 0.0, %v1150
        %v1152 = vpop.f32.mrf.mxu0
        %v1153 = vpop.f32.mrf.mxu0
        %v1154 = vpop.f32.mrf.mxu0
        %1155 = vdwg.mxu0
        %v1156 = vpack.c.bf16 %v1151, %v1151
        %vm1157 = vcmask 60416
        %1158 = vst.msk [vmem:[#allocation5] sm:$0xf] %vm1157, %v1156
        %v1159 = vld [vmem:[#allocation2] sm:$0xf]
        %v1160 = vld [vmem:[#allocation3] sm:$0xf]
        %v1161 = vld [vmem:[#allocation4] sm:$0xf]
        %v1163 = vunpack.c.l.b16 %v1159
        %v1164 = vpack.c.b16 %v1163, %v1163
        %1165 = vrot.lane.b32.xlu0 %v1164, 120
        %v1166 = vpop.permute.xlu0 %1165
        %v1168 = vunpack.c.l.b16 %v1160
        %v1169 = vpack.c.b16 %v1168, %v1168
        %1170 = vrot.lane.b32.xlu0 %v1169, 120
        %v1171 = vpop.permute.xlu0 %1170
        %v1173 = vsel %vm1050, %v1166, 0
        %v1176 = vsel %vm1050, %v1171, 0
        %1178 = vmatprep.subr.bf16.mxu0 0
        %1179 = vmatpush1.bf16.xpose.msra.mxu0 0
        %1180 = vmatprep.subr.bf16.mxu0 0
        %1181 = vmatpush1.bf16.xpose.msra.mxu0 0
        %1182 = vmatprep.subr.bf16.mxu0 0
        %1183 = vmatpush1.bf16.xpose.msra.mxu0 0
        %1184 = vmatprep.subr.bf16.mxu0 0
        %1185 = vmatpush1.bf16.xpose.msra.mxu0 0
        %1186 = vmatprep.subr.bf16.mxu0 0
        %1187 = vmatpush1.bf16.xpose.msra.mxu0 0
        %1188 = vmatprep.subr.bf16.mxu0 0
        %1189 = vmatpush1.bf16.xpose.msra.mxu0 0
        %1190 = vmatprep.subr.bf16.mxu0 0
        %1191 = vmatpush1.bf16.xpose.msra.mxu0 0
        %1192 = vmatprep.subr.bf16.mxu0 0
        %1193 = vmatpush1.bf16.xpose.msra.mxu0 %v1176
        %1194 = vmatprep.subr.bf16.mxu0 0
        %1195 = vmatpush2.bf16.xpose.msra.mxu0 0
        %1196 = vmatprep.subr.bf16.mxu0 0
        %1197 = vmatpush2.bf16.xpose.msra.mxu0 0
        %1198 = vmatprep.subr.bf16.mxu0 0
        %1199 = vmatpush2.bf16.xpose.msra.mxu0 0
        %1200 = vmatprep.subr.bf16.mxu0 0
        %1201 = vmatpush2.bf16.xpose.msra.mxu0 0
        %1202 = vmatprep.subr.bf16.mxu0 0
        %1203 = vmatpush2.bf16.xpose.msra.mxu0 0
        %1204 = vmatprep.subr.bf16.mxu0 0
        %1205 = vmatpush2.bf16.xpose.msra.mxu0 0
        %1206 = vmatprep.subr.bf16.mxu0 0
        %1207 = vmatpush2.bf16.xpose.msra.mxu0 0
        %1208 = vmatprep.subr.bf16.mxu0 0
        %1209 = vmatpush2.bf16.xpose.msra.mxu0 0
        %1210 = vmatprep.mubr.bf16.mxu0 0
        %1211 = vmatmul.mubr.bf16.gmra.mxu0 %v1173
        %v1212 = vpop.f32.mrf.mxu0
        %v1213 = vadd.f32 %v1046, %v1212
        %v1214 = vpop.f32.mrf.mxu0
        %v1215 = vpop.f32.mrf.mxu0
        %v1216 = vpop.f32.mrf.mxu0
        %1217 = vdwg.mxu0
        %v1218 = vsel %vm1050, %v1213, -inf
        %1219 = vmax.xlane.f32.xlu0 %v1218
        %v1220 = vpop.xlane.xlu0 %1219
        %v1221 = vsub.f32 %v1213, %v1220
        %v1222 = vmul.f32 %v1221, 1.442695
        %v1223 = vpow.pop %v1222
        %v1224 = vsel %vm1050, %v1223, 0.0
        %1225 = vadd.xlane.f32.xlu0 %v1224
        %v1226 = vpop.xlane.xlu0 %1225
        %v1227 = vrcp.pop %v1226
        %v1228 = vmul.f32 %v1223, %v1227
        %v1229 = vpack.c.bf16 %v1228, %v1228
        %v1231 = vunpack.c.l.b16 %v1161
        %v1232 = vpack.c.b16 %v1231, %v1231
        %1233 = vrot.lane.b32.xlu0 %v1232, 120
        %v1234 = vpop.permute.xlu0 %1233
        %v1236 = vsel %vm1050, %v1229, 0
        %v1239 = vsel %vm1112, %v1234, 0
        %1241 = vmatprep.subr.bf16.mxu0 0
        %1242 = vmatpush1.bf16.msra.mxu0 0
        %1243 = vmatprep.subr.bf16.mxu0 0
        %1244 = vmatpush1.bf16.msra.mxu0 0
        %1245 = vmatprep.subr.bf16.mxu0 0
        %1246 = vmatpush1.bf16.msra.mxu0 0
        %1247 = vmatprep.subr.bf16.mxu0 0
        %1248 = vmatpush1.bf16.msra.mxu0 0
        %1249 = vmatprep.subr.bf16.mxu0 0
        %1250 = vmatpush1.bf16.msra.mxu0 0
        %1251 = vmatprep.subr.bf16.mxu0 0
        %1252 = vmatpush1.bf16.msra.mxu0 0
        %1253 = vmatprep.subr.bf16.mxu0 0
        %1254 = vmatpush1.bf16.msra.mxu0 0
        %1255 = vmatprep.subr.bf16.mxu0 0
        %1256 = vmatpush1.bf16.msra.mxu0 %v1239
        %1257 = vmatprep.subr.bf16.mxu0 0
        %1258 = vmatpush2.bf16.msra.mxu0 0
        %1259 = vmatprep.subr.bf16.mxu0 0
        %1260 = vmatpush2.bf16.msra.mxu0 0
        %1261 = vmatprep.subr.bf16.mxu0 0
        %1262 = vmatpush2.bf16.msra.mxu0 0
        %1263 = vmatprep.subr.bf16.mxu0 0
        %1264 = vmatpush2.bf16.msra.mxu0 0
        %1265 = vmatprep.subr.bf16.mxu0 0
        %1266 = vmatpush2.bf16.msra.mxu0 0
        %1267 = vmatprep.subr.bf16.mxu0 0
        %1268 = vmatpush2.bf16.msra.mxu0 0
        %1269 = vmatprep.subr.bf16.mxu0 0
        %1270 = vmatpush2.bf16.msra.mxu0 0
        %1271 = vmatprep.subr.bf16.mxu0 0
        %1272 = vmatpush2.bf16.msra.mxu0 0
        %1273 = vmatprep.mubr.bf16.mxu0 0
        %1274 = vmatmul.mubr.bf16.gmra.mxu0 %v1236
        %v1275 = vpop.f32.mrf.mxu0
        %v1276 = vadd.f32 0.0, %v1275
        %v1277 = vpop.f32.mrf.mxu0
        %v1278 = vpop.f32.mrf.mxu0
        %v1279 = vpop.f32.mrf.mxu0
        %1280 = vdwg.mxu0
        %v1281 = vpack.c.bf16 %v1276, %v1276
        %v1283 = vunpack.c.l.b16 %v1281
        %v1284 = vpack.c.b16 %v1283, %v1283
        %1285 = vrot.lane.b32.xlu0 %v1284, 8
        %v1286 = vpop.permute.xlu0 %1285
        %vm1288 = vcmask 126016
        %1289 = vst.msk [vmem:[#allocation5] sm:$0xf] %vm1288, %v1286
        %v1290 = vld [vmem:[#allocation2] sm:$0xf]
        %v1291 = vld [vmem:[#allocation3] sm:$0xf]
        %v1292 = vld [vmem:[#allocation4] sm:$0xf]
        %v1294 = vunpack.c.l.b16 %v1290
        %v1295 = vpack.c.b16 %v1294, %v1294
        %1296 = vrot.lane.b32.xlu0 %v1295, 112
        %v1297 = vpop.permute.xlu0 %1296
        %v1299 = vunpack.c.l.b16 %v1291
        %v1300 = vpack.c.b16 %v1299, %v1299
        %1301 = vrot.lane.b32.xlu0 %v1300, 112
        %v1302 = vpop.permute.xlu0 %1301
        %v1304 = vsel %vm1050, %v1297, 0
        %v1307 = vsel %vm1050, %v1302, 0
        %1309 = vmatprep.subr.bf16.mxu0 0
        %1310 = vmatpush1.bf16.xpose.msra.mxu0 0
        %1311 = vmatprep.subr.bf16.mxu0 0
        %1312 = vmatpush1.bf16.xpose.msra.mxu0 0
        %1313 = vmatprep.subr.bf16.mxu0 0
        %1314 = vmatpush1.bf16.xpose.msra.mxu0 0
        %1315 = vmatprep.subr.bf16.mxu0 0
        %1316 = vmatpush1.bf16.xpose.msra.mxu0 0
        %1317 = vmatprep.subr.bf16.mxu0 0
        %1318 = vmatpush1.bf16.xpose.msra.mxu0 0
        %1319 = vmatprep.subr.bf16.mxu0 0
        %1320 = vmatpush1.bf16.xpose.msra.mxu0 0
        %1321 = vmatprep.subr.bf16.mxu0 0
        %1322 = vmatpush1.bf16.xpose.msra.mxu0 0
        %1323 = vmatprep.subr.bf16.mxu0 0
        %1324 = vmatpush1.bf16.xpose.msra.mxu0 %v1307
        %1325 = vmatprep.subr.bf16.mxu0 0
        %1326 = vmatpush2.bf16.xpose.msra.mxu0 0
        %1327 = vmatprep.subr.bf16.mxu0 0
        %1328 = vmatpush2.bf16.xpose.msra.mxu0 0
        %1329 = vmatprep.subr.bf16.mxu0 0
        %1330 = vmatpush2.bf16.xpose.msra.mxu0 0
        %1331 = vmatprep.subr.bf16.mxu0 0
        %1332 = vmatpush2.bf16.xpose.msra.mxu0 0
        %1333 = vmatprep.subr.bf16.mxu0 0
        %1334 = vmatpush2.bf16.xpose.msra.mxu0 0
        %1335 = vmatprep.subr.bf16.mxu0 0
        %1336 = vmatpush2.bf16.xpose.msra.mxu0 0
        %1337 = vmatprep.subr.bf16.mxu0 0
        %1338 = vmatpush2.bf16.xpose.msra.mxu0 0
        %1339 = vmatprep.subr.bf16.mxu0 0
        %1340 = vmatpush2.bf16.xpose.msra.mxu0 0
        %1341 = vmatprep.mubr.bf16.mxu0 0
        %1342 = vmatmul.mubr.bf16.gmra.mxu0 %v1304
        %v1343 = vpop.f32.mrf.mxu0
        %v1344 = vadd.f32 %v1046, %v1343
        %v1345 = vpop.f32.mrf.mxu0
        %v1346 = vpop.f32.mrf.mxu0
        %v1347 = vpop.f32.mrf.mxu0
        %1348 = vdwg.mxu0
        %v1349 = vsel %vm1050, %v1344, -inf
        %1350 = vmax.xlane.f32.xlu0 %v1349
        %v1351 = vpop.xlane.xlu0 %1350
        %v1352 = vsub.f32 %v1344, %v1351
        %v1353 = vmul.f32 %v1352, 1.442695
        %v1354 = vpow.pop %v1353
        %v1355 = vsel %vm1050, %v1354, 0.0
        %1356 = vadd.xlane.f32.xlu0 %v1355
        %v1357 = vpop.xlane.xlu0 %1356
        %v1358 = vrcp.pop %v1357
        %v1359 = vmul.f32 %v1354, %v1358
        %v1360 = vpack.c.bf16 %v1359, %v1359
        %v1362 = vunpack.c.l.b16 %v1292
        %v1363 = vpack.c.b16 %v1362, %v1362
        %1364 = vrot.lane.b32.xlu0 %v1363, 112
        %v1365 = vpop.permute.xlu0 %1364
        %v1367 = vsel %vm1050, %v1360, 0
        %v1370 = vsel %vm1112, %v1365, 0
        %1372 = vmatprep.subr.bf16.mxu0 0
        %1373 = vmatpush1.bf16.msra.mxu0 0
        %1374 = vmatprep.subr.bf16.mxu0 0
        %1375 = vmatpush1.bf16.msra.mxu0 0
        %1376 = vmatprep.subr.bf16.mxu0 0
        %1377 = vmatpush1.bf16.msra.mxu0 0
        %1378 = vmatprep.subr.bf16.mxu0 0
        %1379 = vmatpush1.bf16.msra.mxu0 0
        %1380 = vmatprep.subr.bf16.mxu0 0
        %1381 = vmatpush1.bf16.msra.mxu0 0
        %1382 = vmatprep.subr.bf16.mxu0 0
        %1383 = vmatpush1.bf16.msra.mxu0 0
        %1384 = vmatprep.subr.bf16.mxu0 0
        %1385 = vmatpush1.bf16.msra.mxu0 0
        %1386 = vmatprep.subr.bf16.mxu0 0
        %1387 = vmatpush1.bf16.msra.mxu0 %v1370
        %1388 = vmatprep.subr.bf16.mxu0 0
        %1389 = vmatpush2.bf16.msra.mxu0 0
        %1390 = vmatprep.subr.bf16.mxu0 0
        %1391 = vmatpush2.bf16.msra.mxu0 0
        %1392 = vmatprep.subr.bf16.mxu0 0
        %1393 = vmatpush2.bf16.msra.mxu0 0
        %1394 = vmatprep.subr.bf16.mxu0 0
        %1395 = vmatpush2.bf16.msra.mxu0 0
        %1396 = vmatprep.subr.bf16.mxu0 0
        %1397 = vmatpush2.bf16.msra.mxu0 0
        %1398 = vmatprep.subr.bf16.mxu0 0
        %1399 = vmatpush2.bf16.msra.mxu0 0
        %1400 = vmatprep.subr.bf16.mxu0 0
        %1401 = vmatpush2.bf16.msra.mxu0 0
        %1402 = vmatprep.subr.bf16.mxu0 0
        %1403 = vmatpush2.bf16.msra.mxu0 0
        %1404 = vmatprep.mubr.bf16.mxu0 0
        %1405 = vmatmul.mubr.bf16.gmra.mxu0 %v1367
        %v1406 = vpop.f32.mrf.mxu0
        %v1407 = vadd.f32 0.0, %v1406
        %v1408 = vpop.f32.mrf.mxu0
        %v1409 = vpop.f32.mrf.mxu0
        %v1410 = vpop.f32.mrf.mxu0
        %1411 = vdwg.mxu0
        %v1412 = vpack.c.bf16 %v1407, %v1407
        %v1414 = vunpack.c.l.b16 %v1412
        %v1415 = vpack.c.b16 %v1414, %v1414
        %1416 = vrot.lane.b32.xlu0 %v1415, 16
        %v1417 = vpop.permute.xlu0 %1416
        %vm1419 = vcmask 191616
        %1420 = vst.msk [vmem:[#allocation5] sm:$0xf] %vm1419, %v1417
        %v1421 = vld [vmem:[#allocation2] sm:$0xf]
        %v1422 = vld [vmem:[#allocation3] sm:$0xf]
        %v1423 = vld [vmem:[#allocation4] sm:$0xf]
        %v1425 = vunpack.c.l.b16 %v1421
        %v1426 = vpack.c.b16 %v1425, %v1425
        %1427 = vrot.lane.b32.xlu0 %v1426, 104
        %v1428 = vpop.permute.xlu0 %1427
        %v1430 = vunpack.c.l.b16 %v1422
        %v1431 = vpack.c.b16 %v1430, %v1430
        %1432 = vrot.lane.b32.xlu0 %v1431, 104
        %v1433 = vpop.permute.xlu0 %1432
        %v1435 = vsel %vm1050, %v1428, 0
        %v1438 = vsel %vm1050, %v1433, 0
        %1440 = vmatprep.subr.bf16.mxu0 0
        %1441 = vmatpush1.bf16.xpose.msra.mxu0 0
        %1442 = vmatprep.subr.bf16.mxu0 0
        %1443 = vmatpush1.bf16.xpose.msra.mxu0 0
        %1444 = vmatprep.subr.bf16.mxu0 0
        %1445 = vmatpush1.bf16.xpose.msra.mxu0 0
        %1446 = vmatprep.subr.bf16.mxu0 0
        %1447 = vmatpush1.bf16.xpose.msra.mxu0 0
        %1448 = vmatprep.subr.bf16.mxu0 0
        %1449 = vmatpush1.bf16.xpose.msra.mxu0 0
        %1450 = vmatprep.subr.bf16.mxu0 0
        %1451 = vmatpush1.bf16.xpose.msra.mxu0 0
        %1452 = vmatprep.subr.bf16.mxu0 0
        %1453 = vmatpush1.bf16.xpose.msra.mxu0 0
        %1454 = vmatprep.subr.bf16.mxu0 0
        %1455 = vmatpush1.bf16.xpose.msra.mxu0 %v1438
        %1456 = vmatprep.subr.bf16.mxu0 0
        %1457 = vmatpush2.bf16.xpose.msra.mxu0 0
        %1458 = vmatprep.subr.bf16.mxu0 0
        %1459 = vmatpush2.bf16.xpose.msra.mxu0 0
        %1460 = vmatprep.subr.bf16.mxu0 0
        %1461 = vmatpush2.bf16.xpose.msra.mxu0 0
        %1462 = vmatprep.subr.bf16.mxu0 0
        %1463 = vmatpush2.bf16.xpose.msra.mxu0 0
        %1464 = vmatprep.subr.bf16.mxu0 0
        %1465 = vmatpush2.bf16.xpose.msra.mxu0 0
        %1466 = vmatprep.subr.bf16.mxu0 0
        %1467 = vmatpush2.bf16.xpose.msra.mxu0 0
        %1468 = vmatprep.subr.bf16.mxu0 0
        %1469 = vmatpush2.bf16.xpose.msra.mxu0 0
        %1470 = vmatprep.subr.bf16.mxu0 0
        %1471 = vmatpush2.bf16.xpose.msra.mxu0 0
        %1472 = vmatprep.mubr.bf16.mxu0 0
        %1473 = vmatmul.mubr.bf16.gmra.mxu0 %v1435
        %v1474 = vpop.f32.mrf.mxu0
        %v1475 = vadd.f32 %v1046, %v1474
        %v1476 = vpop.f32.mrf.mxu0
        %v1477 = vpop.f32.mrf.mxu0
        %v1478 = vpop.f32.mrf.mxu0
        %1479 = vdwg.mxu0
        %v1480 = vsel %vm1050, %v1475, -inf
        %1481 = vmax.xlane.f32.xlu0 %v1480
        %v1482 = vpop.xlane.xlu0 %1481
        %v1483 = vsub.f32 %v1475, %v1482
        %v1484 = vmul.f32 %v1483, 1.442695
        %v1485 = vpow.pop %v1484
        %v1486 = vsel %vm1050, %v1485, 0.0
        %1487 = vadd.xlane.f32.xlu0 %v1486
        %v1488 = vpop.xlane.xlu0 %1487
        %v1489 = vrcp.pop %v1488
        %v1490 = vmul.f32 %v1485, %v1489
        %v1491 = vpack.c.bf16 %v1490, %v1490
        %v1493 = vunpack.c.l.b16 %v1423
        %v1494 = vpack.c.b16 %v1493, %v1493
        %1495 = vrot.lane.b32.xlu0 %v1494, 104
        %v1496 = vpop.permute.xlu0 %1495
        %v1498 = vsel %vm1050, %v1491, 0
        %v1501 = vsel %vm1112, %v1496, 0
        %1503 = vmatprep.subr.bf16.mxu0 0
        %1504 = vmatpush1.bf16.msra.mxu0 0
        %1505 = vmatprep.subr.bf16.mxu0 0
        %1506 = vmatpush1.bf16.msra.mxu0 0
        %1507 = vmatprep.subr.bf16.mxu0 0
        %1508 = vmatpush1.bf16.msra.mxu0 0
        %1509 = vmatprep.subr.bf16.mxu0 0
        %1510 = vmatpush1.bf16.msra.mxu0 0
        %1511 = vmatprep.subr.bf16.mxu0 0
        %1512 = vmatpush1.bf16.msra.mxu0 0
        %1513 = vmatprep.subr.bf16.mxu0 0
        %1514 = vmatpush1.bf16.msra.mxu0 0
        %1515 = vmatprep.subr.bf16.mxu0 0
        %1516 = vmatpush1.bf16.msra.mxu0 0
        %1517 = vmatprep.subr.bf16.mxu0 0
        %1518 = vmatpush1.bf16.msra.mxu0 %v1501
        %1519 = vmatprep.subr.bf16.mxu0 0
        %1520 = vmatpush2.bf16.msra.mxu0 0
        %1521 = vmatprep.subr.bf16.mxu0 0
        %1522 = vmatpush2.bf16.msra.mxu0 0
        %1523 = vmatprep.subr.bf16.mxu0 0
        %1524 = vmatpush2.bf16.msra.mxu0 0
        %1525 = vmatprep.subr.bf16.mxu0 0
        %1526 = vmatpush2.bf16.msra.mxu0 0
        %1527 = vmatprep.subr.bf16.mxu0 0
        %1528 = vmatpush2.bf16.msra.mxu0 0
        %1529 = vmatprep.subr.bf16.mxu0 0
        %1530 = vmatpush2.bf16.msra.mxu0 0
        %1531 = vmatprep.subr.bf16.mxu0 0
        %1532 = vmatpush2.bf16.msra.mxu0 0
        %1533 = vmatprep.subr.bf16.mxu0 0
        %1534 = vmatpush2.bf16.msra.mxu0 0
        %1535 = vmatprep.mubr.bf16.mxu0 0
        %1536 = vmatmul.mubr.bf16.gmra.mxu0 %v1498
        %v1537 = vpop.f32.mrf.mxu0
        %v1538 = vadd.f32 0.0, %v1537
        %v1539 = vpop.f32.mrf.mxu0
        %v1540 = vpop.f32.mrf.mxu0
        %v1541 = vpop.f32.mrf.mxu0
        %1542 = vdwg.mxu0
        %v1543 = vpack.c.bf16 %v1538, %v1538
        %v1545 = vunpack.c.l.b16 %v1543
        %v1546 = vpack.c.b16 %v1545, %v1545
        %1547 = vrot.lane.b32.xlu0 %v1546, 24
        %v1548 = vpop.permute.xlu0 %1547
        %vm1550 = vcmask 257216
        %1551 = vst.msk [vmem:[#allocation5] sm:$0xf] %vm1550, %v1548
        %v1552 = vld [vmem:[#allocation5] sm:$0xf]
        %v1553 = vld [vmem:[%s10] sm:$0xf]
        %v1554 = vld [vmem:[%s10 + $0x4] sm:$0xf]
        %v1555 = vld [vmem:[%s10 + $0x8] sm:$0xf]
        %v1556 = vld [vmem:[%s10 + $0xc] sm:$0xf]
        %v1557 = vld [vmem:[%s11] sm:$0x1]
        %v1559 = vlaneseq
        %v1560 = vshrl.u32 %v1559, 7
        %v1561 = vsub.s32 0, %v1560
        %v1562 = vrot.slane %v1557, %v1561
        %v1568 = vunpack.c.l.b16 %v1553
        %v1569 = vunpack.c.l.b16 %v1554
        %v1570 = vunpack.c.l.b16 %v1555
        %v1571 = vunpack.c.l.b16 %v1556
        %v1572 = vpack.c.b16 %v1569, %v1568
        %v1573 = vpack.c.b16 %v1571, %v1570
        %v1577 = vsel %vm998, %v1552, 0
        %1579 = vmatprep.subr.bf16.mxu0 0
        %1580 = vmatpush1.bf16.msra.mxu0 0
        %1581 = vmatprep.subr.bf16.mxu0 0
        %1582 = vmatpush1.bf16.msra.mxu0 0
        %1583 = vmatprep.subr.bf16.mxu0 0
        %1584 = vmatpush1.bf16.msra.mxu0 0
        %1585 = vmatprep.subr.bf16.mxu0 0
        %1586 = vmatpush1.bf16.msra.mxu0 0
        %1587 = vmatprep.subr.bf16.mxu0 0
        %1588 = vmatpush1.bf16.msra.mxu0 0
        %1589 = vmatprep.subr.bf16.mxu0 0
        %1590 = vmatpush1.bf16.msra.mxu0 0
        %1591 = vmatprep.subr.bf16.mxu0 0
        %1592 = vmatpush1.bf16.msra.mxu0 %v1573
        %1593 = vmatprep.subr.bf16.mxu0 0
        %1594 = vmatpush1.bf16.msra.mxu0 %v1572
        %1595 = vmatprep.subr.bf16.mxu0 0
        %1596 = vmatpush2.bf16.msra.mxu0 0
        %1597 = vmatprep.subr.bf16.mxu0 0
        %1598 = vmatpush2.bf16.msra.mxu0 0
        %1599 = vmatprep.subr.bf16.mxu0 0
        %1600 = vmatpush2.bf16.msra.mxu0 0
        %1601 = vmatprep.subr.bf16.mxu0 0
        %1602 = vmatpush2.bf16.msra.mxu0 0
        %1603 = vmatprep.subr.bf16.mxu0 0
        %1604 = vmatpush2.bf16.msra.mxu0 0
        %1605 = vmatprep.subr.bf16.mxu0 0
        %1606 = vmatpush2.bf16.msra.mxu0 0
        %1607 = vmatprep.subr.bf16.mxu0 0
        %1608 = vmatpush2.bf16.msra.mxu0 0
        %1609 = vmatprep.subr.bf16.mxu0 0
        %1610 = vmatpush2.bf16.msra.mxu0 0
        %1611 = vmatprep.mubr.bf16.mxu0 0
        %1612 = vmatmul.mubr.bf16.gmra.mxu0 %v1577
        %v1613 = vpop.f32.mrf.mxu0
        %v1614 = vadd.f32 %v1562, %v1613
        %v1615 = vpop.f32.mrf.mxu0
        %v1616 = vpop.f32.mrf.mxu0
        %v1617 = vpop.f32.mrf.mxu0
        %1618 = vdwg.mxu0
        %v1619 = vadd.f32 %v1614, %v973
        %v1620 = vsel %vm998, %v1619, 0.0
        %1621 = vadd.xlane.f32.xlu0 %v1620
        %v1622 = vpop.xlane.xlu0 %1621
        %v1623 = vrcp.pop 32.0
        %v1624 = vmul.f32 %v1622, %v1623
        %v1625 = vsub.f32 %v1619, %v1624
        %v1626 = vmul.f32 %v1625, %v1625
        %v1627 = vsel %vm998, %v1626, 0.0
        %1628 = vadd.xlane.f32.xlu0 %v1627
        %v1629 = vpop.xlane.xlu0 %1628
        %v1630 = vmul.f32 %v1629, %v1623
        %v1631 = vadd.f32 %v1630, 1e-05
        %v1632 = vrsqrt.pop %v1631
        %v1633 = vmul.f32 %v1625, %v1632
        %v1634 = vld [vmem:[%s12] sm:$0x1]
        %v1636 = vlaneseq
        %v1637 = vshrl.u32 %v1636, 7
        %v1638 = vsub.s32 0, %v1637
        %v1639 = vrot.slane %v1634, %v1638
        %v1641 = vmul.f32 %v1633, %v1639
        %v1642 = vld [vmem:[%s13] sm:$0x1]
        %v1644 = vlaneseq
        %v1645 = vshrl.u32 %v1644, 7
        %v1646 = vsub.s32 0, %v1645
        %v1647 = vrot.slane %v1642, %v1646
        %v1649 = vadd.f32 %v1641, %v1647
        %v1650 = vpack.c.bf16 %v1649, %v1649
        %v1651 = vld [vmem:[#allocation18] sm:$0xf]
        %v1652 = vld [vmem:[#allocation18 + $0x4] sm:$0xf]
        %v1653 = vld [vmem:[#allocation18 + $0x8] sm:$0xf]
        %v1654 = vld [vmem:[#allocation18 + $0xc] sm:$0xf]
        %v1655 = vld [vmem:[%s15] sm:$0x1]
        %v1657 = vlaneseq
        %v1658 = vshrl.u32 %v1657, 7
        %v1659 = vsub.s32 0, %v1658
        %v1660 = vrot.slane %v1655, %v1659
        %v1666 = vunpack.c.l.b16 %v1651
        %v1667 = vunpack.c.l.b16 %v1652
        %v1668 = vunpack.c.l.b16 %v1653
        %v1669 = vunpack.c.l.b16 %v1654
        %v1670 = vpack.c.b16 %v1667, %v1666
        %v1671 = vpack.c.b16 %v1669, %v1668
        %v1675 = vsel %vm998, %v1650, 0
        %1677 = vmatprep.subr.bf16.mxu0 0
        %1678 = vmatpush1.bf16.msra.mxu0 0
        %1679 = vmatprep.subr.bf16.mxu0 0
        %1680 = vmatpush1.bf16.msra.mxu0 0
        %1681 = vmatprep.subr.bf16.mxu0 0
        %1682 = vmatpush1.bf16.msra.mxu0 0
        %1683 = vmatprep.subr.bf16.mxu0 0
        %1684 = vmatpush1.bf16.msra.mxu0 0
        %1685 = vmatprep.subr.bf16.mxu0 0
        %1686 = vmatpush1.bf16.msra.mxu0 0
        %1687 = vmatprep.subr.bf16.mxu0 0
        %1688 = vmatpush1.bf16.msra.mxu0 0
        %1689 = vmatprep.subr.bf16.mxu0 0
        %1690 = vmatpush1.bf16.msra.mxu0 %v1671
        %1691 = vmatprep.subr.bf16.mxu0 0
        %1692 = vmatpush1.bf16.msra.mxu0 %v1670
        %1693 = vmatprep.subr.bf16.mxu0 0
        %1694 = vmatpush2.bf16.msra.mxu0 0
        %1695 = vmatprep.subr.bf16.mxu0 0
        %1696 = vmatpush2.bf16.msra.mxu0 0
        %1697 = vmatprep.subr.bf16.mxu0 0
        %1698 = vmatpush2.bf16.msra.mxu0 0
        %1699 = vmatprep.subr.bf16.mxu0 0
        %1700 = vmatpush2.bf16.msra.mxu0 0
        %1701 = vmatprep.subr.bf16.mxu0 0
        %1702 = vmatpush2.bf16.msra.mxu0 0
        %1703 = vmatprep.subr.bf16.mxu0 0
        %1704 = vmatpush2.bf16.msra.mxu0 0
        %1705 = vmatprep.subr.bf16.mxu0 0
        %1706 = vmatpush2.bf16.msra.mxu0 0
        %1707 = vmatprep.subr.bf16.mxu0 0
        %1708 = vmatpush2.bf16.msra.mxu0 0
        %1709 = vmatprep.mubr.bf16.mxu0 0
        %1710 = vmatmul.mubr.bf16.gmra.mxu0 %v1675
        %v1711 = vpop.f32.mrf.mxu0
        %v1712 = vadd.f32 %v1660, %v1711
        %v1713 = vpop.f32.mrf.mxu0
        %v1714 = vpop.f32.mrf.mxu0
        %v1715 = vpop.f32.mrf.mxu0
        %1716 = vdwg.mxu0
        %v1717 = vmax.f32 %v1712, 0.0
        %v1718 = vpack.c.bf16 %v1717, %v1717
        %v1719 = vld [vmem:[%s16] sm:$0xf]
        %v1720 = vld [vmem:[%s16 + $0x4] sm:$0xf]
        %v1721 = vld [vmem:[%s16 + $0x8] sm:$0xf]
        %v1722 = vld [vmem:[%s16 + $0xc] sm:$0xf]
        %v1723 = vld [vmem:[%s16 + $0x10] sm:$0xf]
        %v1724 = vld [vmem:[%s16 + $0x14] sm:$0xf]
        %v1725 = vld [vmem:[%s16 + $0x18] sm:$0xf]
        %v1726 = vld [vmem:[%s16 + $0x1c] sm:$0xf]
        %v1727 = vld [vmem:[%s17] sm:$0x1]
        %v1729 = vlaneseq
        %v1730 = vshrl.u32 %v1729, 7
        %v1731 = vsub.s32 0, %v1730
        %v1732 = vrot.slane %v1727, %v1731
        %v1742 = vunpack.c.l.b16 %v1719
        %v1743 = vunpack.c.l.b16 %v1720
        %v1744 = vunpack.c.l.b16 %v1721
        %v1745 = vunpack.c.l.b16 %v1722
        %v1746 = vunpack.c.l.b16 %v1723
        %v1747 = vunpack.c.l.b16 %v1724
        %v1748 = vunpack.c.l.b16 %v1725
        %v1749 = vunpack.c.l.b16 %v1726
        %v1750 = vpack.c.b16 %v1743, %v1742
        %v1751 = vpack.c.b16 %v1745, %v1744
        %v1752 = vpack.c.b16 %v1747, %v1746
        %v1753 = vpack.c.b16 %v1749, %v1748
        %vm1758 = vcmask 523264
        %v1760 = vsel %vm1758, %v1718, 0
        %1762 = vmatprep.subr.bf16.mxu0 0
        %1763 = vmatpush1.bf16.msra.mxu0 0
        %1764 = vmatprep.subr.bf16.mxu0 0
        %1765 = vmatpush1.bf16.msra.mxu0 0
        %1766 = vmatprep.subr.bf16.mxu0 0
        %1767 = vmatpush1.bf16.msra.mxu0 0
        %1768 = vmatprep.subr.bf16.mxu0 0
        %1769 = vmatpush1.bf16.msra.mxu0 0
        %1770 = vmatprep.subr.bf16.mxu0 0
        %1771 = vmatpush1.bf16.msra.mxu0 %v1753
        %1772 = vmatprep.subr.bf16.mxu0 0
        %1773 = vmatpush1.bf16.msra.mxu0 %v1752
        %1774 = vmatprep.subr.bf16.mxu0 0
        %1775 = vmatpush1.bf16.msra.mxu0 %v1751
        %1776 = vmatprep.subr.bf16.mxu0 0
        %1777 = vmatpush1.bf16.msra.mxu0 %v1750
        %1778 = vmatprep.subr.bf16.mxu0 0
        %1779 = vmatpush2.bf16.msra.mxu0 0
        %1780 = vmatprep.subr.bf16.mxu0 0
        %1781 = vmatpush2.bf16.msra.mxu0 0
        %1782 = vmatprep.subr.bf16.mxu0 0
        %1783 = vmatpush2.bf16.msra.mxu0 0
        %1784 = vmatprep.subr.bf16.mxu0 0
        %1785 = vmatpush2.bf16.msra.mxu0 0
        %1786 = vmatprep.subr.bf16.mxu0 0
        %1787 = vmatpush2.bf16.msra.mxu0 0
        %1788 = vmatprep.subr.bf16.mxu0 0
        %1789 = vmatpush2.bf16.msra.mxu0 0
        %1790 = vmatprep.subr.bf16.mxu0 0
        %1791 = vmatpush2.bf16.msra.mxu0 0
        %1792 = vmatprep.subr.bf16.mxu0 0
        %1793 = vmatpush2.bf16.msra.mxu0 0
        %1794 = vmatprep.mubr.bf16.mxu0 0
        %1795 = vmatmul.mubr.bf16.gmra.mxu0 %v1760
        %v1796 = vpop.f32.mrf.mxu0
        %v1797 = vadd.f32 %v1732, %v1796
        %v1798 = vpop.f32.mrf.mxu0
        %v1799 = vpop.f32.mrf.mxu0
        %v1800 = vpop.f32.mrf.mxu0
        %1801 = vdwg.mxu0
        %v1802 = vadd.f32 %v1797, %v1649
        %v1803 = vsel %vm998, %v1802, 0.0
        %1804 = vadd.xlane.f32.xlu0 %v1803
        %v1805 = vpop.xlane.xlu0 %1804
        %v1806 = vmul.f32 %v1805, %v1623
        %v1807 = vsub.f32 %v1802, %v1806
        %v1808 = vmul.f32 %v1807, %v1807
        %v1809 = vsel %vm998, %v1808, 0.0
        %1810 = vadd.xlane.f32.xlu0 %v1809
        %v1811 = vpop.xlane.xlu0 %1810
        %v1812 = vmul.f32 %v1811, %v1623
        %v1813 = vadd.f32 %v1812, 1e-05
        %v1814 = vrsqrt.pop %v1813
        %v1815 = vmul.f32 %v1807, %v1814
        %v1816 = vld [vmem:[%s18] sm:$0x1]
        %v1818 = vlaneseq
        %v1819 = vshrl.u32 %v1818, 7
        %v1820 = vsub.s32 0, %v1819
        %v1821 = vrot.slane %v1816, %v1820
        %v1823 = vmul.f32 %v1815, %v1821
        %v1824 = vld [vmem:[%s19] sm:$0x1]
        %v1826 = vlaneseq
        %v1827 = vshrl.u32 %v1826, 7
        %v1828 = vsub.s32 0, %v1827
        %v1829 = vrot.slane %v1824, %v1828
        %v1831 = vadd.f32 %v1823, %v1829
        %1832 = vst.msk [vmem:[%s820] sm:$0xff] %vm998, %v1831
        %s1833 = sand.u32 %s509, 1
        %s1834 = scalar_lea.sflag [#allocation8], %s1833
        %s1835 = sand.u32 %s509, 1
        %s1836 = smul.addr %s1835, 8
        %s1837 = scalar_lea.vmem [#allocation20], %s1836
        // Predicated region
        $region137: #{tpu_custom_call.1} parent=99 // pred_check
          %p1838 = pneg %p519
        $region138: #{tpu_custom_call.1} parent=99 // pred_check_branch
          %1840 = sbr.rel (%p1838) target = $region140
        $region139: #{tpu_custom_call.1} parent=99 // pred_region
          %s1842 = ssub.s32 128, 128
          %1843 = vsyncadd %s1834, %s1842
          %s1844 = sadd.s32 %s48, %s47
          %s1845 = smul.addr %s1844, 128
          %s1846 = scalar_lea.hbm %s20, %s1845
          %s1848 = sshll.u32 %s1837, 4
          %s1849 = int_to_ptr.vmem [resolvable:$true] %s1848
          %1851 = dma.vmem_to_hbm [thread:$0]  %s1849, 128, %s1846, %s1834
        $region140: #{tpu_custom_call.1} parent=99 // pred_fallthru
          _
      $region100: #{tpu_custom_call.1} parent=5 // pred_fallthru
        _
      %p1852 = scmp.le.s32.totalorder 2, %s38
      // Predicated region
      $region141: #{tpu_custom_call.1} parent=5 // pred_check
        %p1853 = pneg %p1852
      $region142: #{tpu_custom_call.1} parent=5 // pred_check_branch
        %1855 = sbr.rel (%p1853) target = $region144
      $region143: #{tpu_custom_call.1} parent=5 // pred_region
        %s1856 = ssub.s32 %s38, 2
        // Predicated region
        $region145: #{tpu_custom_call.1} parent=143 // pred_check
          %p1857 = pneg %p525
        $region146: #{tpu_custom_call.1} parent=143 // pred_check_branch
          %1859 = sbr.rel (%p1857) target = $region148
        $region147: #{tpu_custom_call.1} parent=143 // pred_region
          %s1860 = sand.u32 %s510, 1
          %s1861 = scalar_lea.sflag [#allocation8], %s1860
          %s1862 = sand.u32 %s510, 1
          %s1863 = smul.addr %s1862, 8
          %s1864 = scalar_lea.vmem [#allocation20], %s1863
          %1865 = dma.done %s1861, 128
        $region148: #{tpu_custom_call.1} parent=143 // pred_fallthru
          _
      $region144: #{tpu_custom_call.1} parent=5 // pred_fallthru
        _
    $region6: #{tpu_custom_call.1} parent=1 // loop_footer
      %s42 = sadd.s32 1, %s38
    $region7: #{tpu_custom_call.1} parent=1 // loop_footer_branch
      %37 = sbr.rel target = $region3
    $region8: #{tpu_custom_call.1} parent=1 // loop_exit
      _
    %1866 = vsyncpa [#allocation7], 1
    %s1867 = scalar_lea.sflag [#allocation7], 1
    %1868 = vsyncpa %s1867, 1
    %1869 = vsyncpa [#allocation10], 1
    %s1870 = scalar_lea.sflag [#allocation10], 1
    %1871 = vsyncpa %s1870, 1
    %1872 = vsyncpa [#allocation13], 1
    %1873 = vsyncpa [#allocation16], 1
    %1874 = vsyncpa [#allocation19], 1
    %1875 = vsyncpa [#allocation8], 1
    %s1876 = scalar_lea.sflag [#allocation8], 1
    %1877 = vsyncpa %s1876, 1

</llo_original>
